<compile_context>
chip_gen: v6e
topology: v6e:2x2x1
jax: 0.10.0
libtpu: 0.0.40
codegen_flags: <defaults>
</compile_context>

<pallas_src>
import jax
import jax.numpy as jnp
from jax import lax
from jax.experimental import pallas as pl
from jax.experimental.pallas import tpu as pltpu  # noqa: F401  (TPU backend)


# --------------------------------------------------------------------------
# Fused Pallas kernel: conv1-matmul -> (conv2 + avg-pool) taps -> +bias -> sigmoid
# --------------------------------------------------------------------------
def _fused_kernel(p1_ref, w1m_ref, a_ref, b_ref, beff_ref, o_ref):
    # conv1: (N*H1*W1, 9*Cin2) @ (9*Cin2, Cout) on the MXU (bias folded into beff).
    y1 = jnp.dot(p1_ref[...], w1m_ref[...], preferred_element_type=jnp.float32)

    # conv2 + global-average-pool, collapsed into 9 (A_t, B_t) sandwich matmuls
    # on the VMEM-resident y1 (never written back to HBM).
    n_taps = a_ref.shape[0]
    acc = jnp.zeros(o_ref.shape, jnp.float32)
    for t in range(n_taps):  # static unroll (9 taps)
        s = jnp.dot(a_ref[t], y1, preferred_element_type=jnp.float32)          # (N, Cout)
        acc = acc + jnp.dot(s, b_ref[t], preferred_element_type=jnp.float32)   # (N, Cout)

    z = acc + beff_ref[...]                   # effective bias (b1 + b2 folded)
    o_ref[...] = 1.0 / (1.0 + jnp.exp(-z))    # sigmoid epilogue (EUP)


def fused_weight_learning(p1f, w1m, A, B, beff, n_batch, c_out):
    """p1f: (N*H1*W1, K); w1m: (K, Cout); A: (9, N, N*H1*W1); B: (9, Cout, Cout);
    beff: (1, Cout)  ->  (N, Cout)."""
    M, K = p1f.shape
    T = A.shape[0]
    return pl.pallas_call(
        _fused_kernel,
        out_shape=jax.ShapeDtypeStruct((n_batch, c_out), jnp.float32),
        grid=(1,),
        in_specs=[
            pl.BlockSpec((M, K), lambda i: (0, 0)),
            pl.BlockSpec((K, c_out), lambda i: (0, 0)),
            pl.BlockSpec((T, n_batch, M), lambda i: (0, 0, 0)),
            pl.BlockSpec((T, c_out, c_out), lambda i: (0, 0, 0)),
            pl.BlockSpec((1, c_out), lambda i: (0, 0)),
        ],
        out_specs=pl.BlockSpec((n_batch, c_out), lambda i: (0, 0)),
    )(p1f, w1m, A, B, beff)


# --------------------------------------------------------------------------
# Glue: im2col for conv1 (data movement only) and parameter preprocessing
# --------------------------------------------------------------------------
def conv_out_size(s, k=3, stride=2, pad=1):
    return (s + 2 * pad - k) // stride + 1


def im2col_nhwc(x, k=3, stride=2, pad=1):
    """x: (N, H, W, C) -> (patches (N, Ho*Wo, k*k*C), Ho, Wo)."""
    N, H, W, C = x.shape
    xp = jnp.pad(x, ((0, 0), (pad, pad), (pad, pad), (0, 0)))
    Ho = conv_out_size(H, k, stride, pad)
    Wo = conv_out_size(W, k, stride, pad)
    taps = []
    for dy in range(k):
        for dx in range(k):
            taps.append(
                xp[:, dy:dy + stride * Ho:stride, dx:dx + stride * Wo:stride, :]
            )
    p = jnp.stack(taps, axis=-2)            # (N, Ho, Wo, k*k, C) — (kh, kw) order
    return p.reshape(N, Ho * Wo, k * k * C), Ho, Wo


def conv_weight_to_matmul(w):
    """PyTorch conv weight (Cout, Cin, kh, kw) -> (kh*kw*Cin, Cout)."""
    Cout, Cin, kh, kw = w.shape
    return jnp.transpose(w, (2, 3, 1, 0)).reshape(kh * kw * Cin, Cout)


def precompute_params(w1, b1, w2, b2, n_batch, H, W):
    """Fold conv2 + global-avg-pool + both biases into fused-kernel operands."""
    c_out = w1.shape[0]
    H1, W1 = conv_out_size(H), conv_out_size(W)
    H2, W2 = conv_out_size(H1), conv_out_size(W1)
    inv_pool = 1.0 / float(H2 * W2)

    w1m = conv_weight_to_matmul(w1)                        # (9*Cin2, Cout)

    def tap_mask(size_in, size_out, d):
        # rows of y1 hit by conv2 tap offset d (stride 2, pad 1), as 0/1 mask
        pos = 2 * jnp.arange(size_out) + d - 1
        valid = (pos >= 0) & (pos < size_in)
        onehot = (pos[:, None] == jnp.arange(size_in)[None, :]) & valid[:, None]
        return jnp.sum(onehot.astype(jnp.float32), axis=0)  # (size_in,)

    eye_n = jnp.eye(n_batch, dtype=jnp.float32)
    a_list, b_list = [], []
    beff = b2.astype(jnp.float32)
    for dy in range(3):
        rm = tap_mask(H1, H2, dy)
        for dx in range(3):
            cm = tap_mask(W1, W2, dx)
            spat = (rm[:, None] * cm[None, :]).reshape(-1) * inv_pool   # (H1*W1,)
            a_t = (eye_n[:, :, None] * spat[None, None, :]).reshape(
                n_batch, n_batch * H1 * W1)
            b_t = jnp.transpose(w2[:, :, dy, dx])                        # (c', c)
            a_list.append(a_t)
            b_list.append(b_t)
            # conv1-bias contribution through this tap + pool (constant)
            beff = beff + (jnp.sum(rm) * jnp.sum(cm) * inv_pool) * (b1 @ b_t)
    A = jnp.stack(a_list)                                   # (9, N, N*H1*W1)
    B = jnp.stack(b_list)                                   # (9, Cout, Cout)
    return {"w1m": w1m, "A": A, "B": B, "beff": beff.reshape(1, c_out)}


def weight_learning_forward(x1, x2, params):
    """x1, x2: NCHW (N, Cin, H, W) -> (N, Cout, 1, 1), matching PyTorch."""
    n_batch = x1.shape[0]
    x = jnp.concatenate([x1, x2], axis=1)          # (N, 2*Cin, H, W)
    x = jnp.transpose(x, (0, 2, 3, 1))             # NHWC
    # im2col of the raw input stays in XLA (pure data movement, read once).
    p1, H1, W1 = im2col_nhwc(x)                    # (N, H1*W1, 9*2Cin)
    p1f = p1.reshape(n_batch * H1 * W1, p1.shape[-1])
    c_out = params["w1m"].shape[1]
    out = fused_weight_learning(p1f, params["w1m"], params["A"], params["B"],
                                params["beff"], n_batch, c_out)    # (N, Cout)
    return out[:, :, None, None]                                   # (N, Cout, 1, 1)


# --------------------------------------------------------------------------
# Pure-JAX reference (for correctness check)
# --------------------------------------------------------------------------
def reference_forward(x1, x2, w1, b1, w2, b2):
    x = jnp.concatenate([x1, x2], axis=1)
    dn = ("NCHW", "OIHW", "NCHW")
    y = lax.conv_general_dilated(x, w1, (2, 2), [(1, 1), (1, 1)],
                                 dimension_numbers=dn) + b1[None, :, None, None]
    y = lax.conv_general_dilated(y, w2, (2, 2), [(1, 1), (1, 1)],
                                 dimension_numbers=dn) + b2[None, :, None, None]
    y = jnp.mean(y, axis=(2, 3), keepdims=True)
    return jax.nn.sigmoid(y)


# --------------------------------------------------------------------------
if __name__ == "__main__":
    key = jax.random.PRNGKey(0)
    k_x1, k_x2, k_w1, k_b1, k_w2, k_b2 = jax.random.split(key, 6)

    in_channels, out_channels = 4, 8
    N, H, W = 2, 16, 16

    x1 = jax.random.normal(k_x1, (N, in_channels, H, W), jnp.float32)
    x2 = jax.random.normal(k_x2, (N, in_channels, H, W), jnp.float32)

    # Deterministic synthetic parameters (same shapes as nn.Conv2d in __init__).
    w1 = 0.1 * jax.random.normal(k_w1, (out_channels, 2 * in_channels, 3, 3), jnp.float32)
    b1 = 0.1 * jax.random.normal(k_b1, (out_channels,), jnp.float32)
    w2 = 0.1 * jax.random.normal(k_w2, (out_channels, out_channels, 3, 3), jnp.float32)
    b2 = 0.1 * jax.random.normal(k_b2, (out_channels,), jnp.float32)

    params = precompute_params(w1, b1, w2, b2, N, H, W)

    out = jax.jit(weight_learning_forward)(x1, x2, params)
    out = jax.block_until_ready(out)

    ref = reference_forward(x1, x2, w1, b1, w2, b2)
    assert out.shape == (N, out_channels, 1, 1), out.shape
    assert jnp.allclose(out, ref, atol=1e-4, rtol=1e-4), (
        float(jnp.max(jnp.abs(out - ref))))

    print("KERNEL_OK")
</pallas_src>

<mosaic_0001>
module attributes {stable_mosaic.version = 11 : i64} {
  func.func @_fused_kernel(%arg0: i32, %arg1: memref<128x72xf32, #tpu.memory_space<vmem>>, %arg2: memref<72x8xf32, #tpu.memory_space<vmem>>, %arg3: memref<9x2x128xf32, #tpu.memory_space<vmem>>, %arg4: memref<9x8x8xf32, #tpu.memory_space<vmem>>, %arg5: memref<1x8xf32, #tpu.memory_space<vmem>>, %arg6: memref<2x8xf32, #tpu.memory_space<vmem>>) attributes {dimension_semantics = [#tpu.dimension_semantics<arbitrary>], iteration_bounds = array<i64: 1>, scalar_prefetch = 0 : i64, scratch_operands = 0 : i64, tpu.core_type = #tpu.core_type<tc>, window_params = [{pipeline_mode = #tpu.pipeline_mode<synchronous>, transform_indices = @transform_0, window_bounds = array<i64: 128, 72>}, {pipeline_mode = #tpu.pipeline_mode<synchronous>, transform_indices = @transform_1, window_bounds = array<i64: 72, 8>}, {pipeline_mode = #tpu.pipeline_mode<synchronous>, transform_indices = @transform_2, window_bounds = array<i64: 9, 2, 128>}, {pipeline_mode = #tpu.pipeline_mode<synchronous>, transform_indices = @transform_3, window_bounds = array<i64: 9, 8, 8>}, {pipeline_mode = #tpu.pipeline_mode<synchronous>, transform_indices = @transform_4, window_bounds = array<i64: 1, 8>}, {pipeline_mode = #tpu.pipeline_mode<synchronous>, transform_indices = @transform_5, window_bounds = array<i64: 2, 8>}]} {
    %c0 = arith.constant 0 : index
    %c0_0 = arith.constant 0 : index
    %0 = vector.load %arg1[%c0, %c0_0] : memref<128x72xf32, #tpu.memory_space<vmem>>, vector<128x72xf32>
    %c0_1 = arith.constant 0 : index
    %c0_2 = arith.constant 0 : index
    %1 = vector.load %arg2[%c0_1, %c0_2] : memref<72x8xf32, #tpu.memory_space<vmem>>, vector<72x8xf32>
    %cst = arith.constant dense<0.000000e+00> : vector<128x8xf32>
    %2 = tpu.matmul %0, %1, %cst {dimension_numbers = #tpu.dot_dimension_numbers<[1], [0], [0], [1], [0, 0, 1, 1], [], []>} : vector<128x72xf32>, vector<72x8xf32>, vector<128x8xf32> -> vector<128x8xf32>
    %cst_3 = arith.constant 0.000000e+00 : f32
    %3 = vector.broadcast %cst_3 : f32 to vector<2x8xf32>
    %c0_4 = arith.constant 0 : index
    %c0_5 = arith.constant 0 : index
    %c0_6 = arith.constant 0 : index
    %4 = vector.load %arg3[%c0_4, %c0_5, %c0_6] : memref<9x2x128xf32, #tpu.memory_space<vmem>>, vector<1x2x128xf32>
    %5 = vector.shape_cast %4 : vector<1x2x128xf32> to vector<2x128xf32>
    %cst_7 = arith.constant dense<0.000000e+00> : vector<2x8xf32>
    %6 = tpu.matmul %5, %2, %cst_7 {dimension_numbers = #tpu.dot_dimension_numbers<[1], [0], [0], [1], [0, 0, 1, 1], [], []>} : vector<2x128xf32>, vector<128x8xf32>, vector<2x8xf32> -> vector<2x8xf32>
    %c0_8 = arith.constant 0 : index
    %c0_9 = arith.constant 0 : index
    %c0_10 = arith.constant 0 : index
    %7 = vector.load %arg4[%c0_8, %c0_9, %c0_10] : memref<9x8x8xf32, #tpu.memory_space<vmem>>, vector<1x8x8xf32>
    %8 = vector.shape_cast %7 : vector<1x8x8xf32> to vector<8x8xf32>
    %cst_11 = arith.constant dense<0.000000e+00> : vector<2x8xf32>
    %9 = tpu.matmul %6, %8, %cst_11 {dimension_numbers = #tpu.dot_dimension_numbers<[1], [0], [0], [1], [0, 0, 1, 1], [], []>} : vector<2x8xf32>, vector<8x8xf32>, vector<2x8xf32> -> vector<2x8xf32>
    %10 = arith.addf %3, %9 : vector<2x8xf32>
    %c1 = arith.constant 1 : index
    %c0_12 = arith.constant 0 : index
    %c0_13 = arith.constant 0 : index
    %11 = vector.load %arg3[%c1, %c0_12, %c0_13] : memref<9x2x128xf32, #tpu.memory_space<vmem>>, vector<1x2x128xf32>
    %12 = vector.shape_cast %11 : vector<1x2x128xf32> to vector<2x128xf32>
    %cst_14 = arith.constant dense<0.000000e+00> : vector<2x8xf32>
    %13 = tpu.matmul %12, %2, %cst_14 {dimension_numbers = #tpu.dot_dimension_numbers<[1], [0], [0], [1], [0, 0, 1, 1], [], []>} : vector<2x128xf32>, vector<128x8xf32>, vector<2x8xf32> -> vector<2x8xf32>
    %c1_15 = arith.constant 1 : index
    %c0_16 = arith.constant 0 : index
    %c0_17 = arith.constant 0 : index
    %14 = vector.load %arg4[%c1_15, %c0_16, %c0_17] : memref<9x8x8xf32, #tpu.memory_space<vmem>>, vector<1x8x8xf32>
    %15 = vector.shape_cast %14 : vector<1x8x8xf32> to vector<8x8xf32>
    %cst_18 = arith.constant dense<0.000000e+00> : vector<2x8xf32>
    %16 = tpu.matmul %13, %15, %cst_18 {dimension_numbers = #tpu.dot_dimension_numbers<[1], [0], [0], [1], [0, 0, 1, 1], [], []>} : vector<2x8xf32>, vector<8x8xf32>, vector<2x8xf32> -> vector<2x8xf32>
    %17 = arith.addf %10, %16 : vector<2x8xf32>
    %c2 = arith.constant 2 : index
    %c0_19 = arith.constant 0 : index
    %c0_20 = arith.constant 0 : index
    %18 = vector.load %arg3[%c2, %c0_19, %c0_20] : memref<9x2x128xf32, #tpu.memory_space<vmem>>, vector<1x2x128xf32>
    %19 = vector.shape_cast %18 : vector<1x2x128xf32> to vector<2x128xf32>
    %cst_21 = arith.constant dense<0.000000e+00> : vector<2x8xf32>
    %20 = tpu.matmul %19, %2, %cst_21 {dimension_numbers = #tpu.dot_dimension_numbers<[1], [0], [0], [1], [0, 0, 1, 1], [], []>} : vector<2x128xf32>, vector<128x8xf32>, vector<2x8xf32> -> vector<2x8xf32>
    %c2_22 = arith.constant 2 : index
    %c0_23 = arith.constant 0 : index
    %c0_24 = arith.constant 0 : index
    %21 = vector.load %arg4[%c2_22, %c0_23, %c0_24] : memref<9x8x8xf32, #tpu.memory_space<vmem>>, vector<1x8x8xf32>
    %22 = vector.shape_cast %21 : vector<1x8x8xf32> to vector<8x8xf32>
    %cst_25 = arith.constant dense<0.000000e+00> : vector<2x8xf32>
    %23 = tpu.matmul %20, %22, %cst_25 {dimension_numbers = #tpu.dot_dimension_numbers<[1], [0], [0], [1], [0, 0, 1, 1], [], []>} : vector<2x8xf32>, vector<8x8xf32>, vector<2x8xf32> -> vector<2x8xf32>
    %24 = arith.addf %17, %23 : vector<2x8xf32>
    %c3 = arith.constant 3 : index
    %c0_26 = arith.constant 0 : index
    %c0_27 = arith.constant 0 : index
    %25 = vector.load %arg3[%c3, %c0_26, %c0_27] : memref<9x2x128xf32, #tpu.memory_space<vmem>>, vector<1x2x128xf32>
    %26 = vector.shape_cast %25 : vector<1x2x128xf32> to vector<2x128xf32>
    %cst_28 = arith.constant dense<0.000000e+00> : vector<2x8xf32>
    %27 = tpu.matmul %26, %2, %cst_28 {dimension_numbers = #tpu.dot_dimension_numbers<[1], [0], [0], [1], [0, 0, 1, 1], [], []>} : vector<2x128xf32>, vector<128x8xf32>, vector<2x8xf32> -> vector<2x8xf32>
    %c3_29 = arith.constant 3 : index
    %c0_30 = arith.constant 0 : index
    %c0_31 = arith.constant 0 : index
    %28 = vector.load %arg4[%c3_29, %c0_30, %c0_31] : memref<9x8x8xf32, #tpu.memory_space<vmem>>, vector<1x8x8xf32>
    %29 = vector.shape_cast %28 : vector<1x8x8xf32> to vector<8x8xf32>
    %cst_32 = arith.constant dense<0.000000e+00> : vector<2x8xf32>
    %30 = tpu.matmul %27, %29, %cst_32 {dimension_numbers = #tpu.dot_dimension_numbers<[1], [0], [0], [1], [0, 0, 1, 1], [], []>} : vector<2x8xf32>, vector<8x8xf32>, vector<2x8xf32> -> vector<2x8xf32>
    %31 = arith.addf %24, %30 : vector<2x8xf32>
    %c4 = arith.constant 4 : index
    %c0_33 = arith.constant 0 : index
    %c0_34 = arith.constant 0 : index
    %32 = vector.load %arg3[%c4, %c0_33, %c0_34] : memref<9x2x128xf32, #tpu.memory_space<vmem>>, vector<1x2x128xf32>
    %33 = vector.shape_cast %32 : vector<1x2x128xf32> to vector<2x128xf32>
    %cst_35 = arith.constant dense<0.000000e+00> : vector<2x8xf32>
    %34 = tpu.matmul %33, %2, %cst_35 {dimension_numbers = #tpu.dot_dimension_numbers<[1], [0], [0], [1], [0, 0, 1, 1], [], []>} : vector<2x128xf32>, vector<128x8xf32>, vector<2x8xf32> -> vector<2x8xf32>
    %c4_36 = arith.constant 4 : index
    %c0_37 = arith.constant 0 : index
    %c0_38 = arith.constant 0 : index
    %35 = vector.load %arg4[%c4_36, %c0_37, %c0_38] : memref<9x8x8xf32, #tpu.memory_space<vmem>>, vector<1x8x8xf32>
    %36 = vector.shape_cast %35 : vector<1x8x8xf32> to vector<8x8xf32>
    %cst_39 = arith.constant dense<0.000000e+00> : vector<2x8xf32>
    %37 = tpu.matmul %34, %36, %cst_39 {dimension_numbers = #tpu.dot_dimension_numbers<[1], [0], [0], [1], [0, 0, 1, 1], [], []>} : vector<2x8xf32>, vector<8x8xf32>, vector<2x8xf32> -> vector<2x8xf32>
    %38 = arith.addf %31, %37 : vector<2x8xf32>
    %c5 = arith.constant 5 : index
    %c0_40 = arith.constant 0 : index
    %c0_41 = arith.constant 0 : index
    %39 = vector.load %arg3[%c5, %c0_40, %c0_41] : memref<9x2x128xf32, #tpu.memory_space<vmem>>, vector<1x2x128xf32>
    %40 = vector.shape_cast %39 : vector<1x2x128xf32> to vector<2x128xf32>
    %cst_42 = arith.constant dense<0.000000e+00> : vector<2x8xf32>
    %41 = tpu.matmul %40, %2, %cst_42 {dimension_numbers = #tpu.dot_dimension_numbers<[1], [0], [0], [1], [0, 0, 1, 1], [], []>} : vector<2x128xf32>, vector<128x8xf32>, vector<2x8xf32> -> vector<2x8xf32>
    %c5_43 = arith.constant 5 : index
    %c0_44 = arith.constant 0 : index
    %c0_45 = arith.constant 0 : index
    %42 = vector.load %arg4[%c5_43, %c0_44, %c0_45] : memref<9x8x8xf32, #tpu.memory_space<vmem>>, vector<1x8x8xf32>
    %43 = vector.shape_cast %42 : vector<1x8x8xf32> to vector<8x8xf32>
    %cst_46 = arith.constant dense<0.000000e+00> : vector<2x8xf32>
    %44 = tpu.matmul %41, %43, %cst_46 {dimension_numbers = #tpu.dot_dimension_numbers<[1], [0], [0], [1], [0, 0, 1, 1], [], []>} : vector<2x8xf32>, vector<8x8xf32>, vector<2x8xf32> -> vector<2x8xf32>
    %45 = arith.addf %38, %44 : vector<2x8xf32>
    %c6 = arith.constant 6 : index
    %c0_47 = arith.constant 0 : index
    %c0_48 = arith.constant 0 : index
    %46 = vector.load %arg3[%c6, %c0_47, %c0_48] : memref<9x2x128xf32, #tpu.memory_space<vmem>>, vector<1x2x128xf32>
    %47 = vector.shape_cast %46 : vector<1x2x128xf32> to vector<2x128xf32>
    %cst_49 = arith.constant dense<0.000000e+00> : vector<2x8xf32>
    %48 = tpu.matmul %47, %2, %cst_49 {dimension_numbers = #tpu.dot_dimension_numbers<[1], [0], [0], [1], [0, 0, 1, 1], [], []>} : vector<2x128xf32>, vector<128x8xf32>, vector<2x8xf32> -> vector<2x8xf32>
    %c6_50 = arith.constant 6 : index
    %c0_51 = arith.constant 0 : index
    %c0_52 = arith.constant 0 : index
    %49 = vector.load %arg4[%c6_50, %c0_51, %c0_52] : memref<9x8x8xf32, #tpu.memory_space<vmem>>, vector<1x8x8xf32>
    %50 = vector.shape_cast %49 : vector<1x8x8xf32> to vector<8x8xf32>
    %cst_53 = arith.constant dense<0.000000e+00> : vector<2x8xf32>
    %51 = tpu.matmul %48, %50, %cst_53 {dimension_numbers = #tpu.dot_dimension_numbers<[1], [0], [0], [1], [0, 0, 1, 1], [], []>} : vector<2x8xf32>, vector<8x8xf32>, vector<2x8xf32> -> vector<2x8xf32>
    %52 = arith.addf %45, %51 : vector<2x8xf32>
    %c7 = arith.constant 7 : index
    %c0_54 = arith.constant 0 : index
    %c0_55 = arith.constant 0 : index
    %53 = vector.load %arg3[%c7, %c0_54, %c0_55] : memref<9x2x128xf32, #tpu.memory_space<vmem>>, vector<1x2x128xf32>
    %54 = vector.shape_cast %53 : vector<1x2x128xf32> to vector<2x128xf32>
    %cst_56 = arith.constant dense<0.000000e+00> : vector<2x8xf32>
    %55 = tpu.matmul %54, %2, %cst_56 {dimension_numbers = #tpu.dot_dimension_numbers<[1], [0], [0], [1], [0, 0, 1, 1], [], []>} : vector<2x128xf32>, vector<128x8xf32>, vector<2x8xf32> -> vector<2x8xf32>
    %c7_57 = arith.constant 7 : index
    %c0_58 = arith.constant 0 : index
    %c0_59 = arith.constant 0 : index
    %56 = vector.load %arg4[%c7_57, %c0_58, %c0_59] : memref<9x8x8xf32, #tpu.memory_space<vmem>>, vector<1x8x8xf32>
    %57 = vector.shape_cast %56 : vector<1x8x8xf32> to vector<8x8xf32>
    %cst_60 = arith.constant dense<0.000000e+00> : vector<2x8xf32>
    %58 = tpu.matmul %55, %57, %cst_60 {dimension_numbers = #tpu.dot_dimension_numbers<[1], [0], [0], [1], [0, 0, 1, 1], [], []>} : vector<2x8xf32>, vector<8x8xf32>, vector<2x8xf32> -> vector<2x8xf32>
    %59 = arith.addf %52, %58 : vector<2x8xf32>
    %c8 = arith.constant 8 : index
    %c0_61 = arith.constant 0 : index
    %c0_62 = arith.constant 0 : index
    %60 = vector.load %arg3[%c8, %c0_61, %c0_62] : memref<9x2x128xf32, #tpu.memory_space<vmem>>, vector<1x2x128xf32>
    %61 = vector.shape_cast %60 : vector<1x2x128xf32> to vector<2x128xf32>
    %cst_63 = arith.constant dense<0.000000e+00> : vector<2x8xf32>
    %62 = tpu.matmul %61, %2, %cst_63 {dimension_numbers = #tpu.dot_dimension_numbers<[1], [0], [0], [1], [0, 0, 1, 1], [], []>} : vector<2x128xf32>, vector<128x8xf32>, vector<2x8xf32> -> vector<2x8xf32>
    %c8_64 = arith.constant 8 : index
    %c0_65 = arith.constant 0 : index
    %c0_66 = arith.constant 0 : index
    %63 = vector.load %arg4[%c8_64, %c0_65, %c0_66] : memref<9x8x8xf32, #tpu.memory_space<vmem>>, vector<1x8x8xf32>
    %64 = vector.shape_cast %63 : vector<1x8x8xf32> to vector<8x8xf32>
    %cst_67 = arith.constant dense<0.000000e+00> : vector<2x8xf32>
    %65 = tpu.matmul %62, %64, %cst_67 {dimension_numbers = #tpu.dot_dimension_numbers<[1], [0], [0], [1], [0, 0, 1, 1], [], []>} : vector<2x8xf32>, vector<8x8xf32>, vector<2x8xf32> -> vector<2x8xf32>
    %66 = arith.addf %59, %65 : vector<2x8xf32>
    %c0_68 = arith.constant 0 : index
    %c0_69 = arith.constant 0 : index
    %67 = vector.load %arg5[%c0_68, %c0_69] : memref<1x8xf32, #tpu.memory_space<vmem>>, vector<1x8xf32>
    %68 = vector.broadcast %67 : vector<1x8xf32> to vector<2x8xf32>
    %69 = arith.addf %66, %68 : vector<2x8xf32>
    %cst_70 = arith.constant 0.000000e+00 : f32
    %70 = vector.broadcast %cst_70 : f32 to vector<2x8xf32>
    %71 = arith.subf %70, %69 : vector<2x8xf32>
    %72 = math.exp %71 : vector<2x8xf32>
    %cst_71 = arith.constant 1.000000e+00 : f32
    %73 = vector.broadcast %cst_71 : f32 to vector<2x8xf32>
    %74 = arith.addf %73, %72 : vector<2x8xf32>
    %cst_72 = arith.constant 1.000000e+00 : f32
    %75 = vector.broadcast %cst_72 : f32 to vector<2x8xf32>
    %76 = arith.divf %75, %74 : vector<2x8xf32>
    %c0_73 = arith.constant 0 : index
    %c0_74 = arith.constant 0 : index
    %77 = vector.load %arg6[%c0_73, %c0_74] : memref<2x8xf32, #tpu.memory_space<vmem>>, vector<2x8xf32>
    tpu.vector_store %arg6[%c0_73, %c0_74], %76 {strides = array<i32>} : memref<2x8xf32, #tpu.memory_space<vmem>>, vector<2x8xf32>,
    return
  }
  func.func @transform_0(%arg0: i32) -> (i32, i32) {
    %c0_i32 = arith.constant 0 : i32
    %c0_i32_0 = arith.constant 0 : i32
    %c0_i32_1 = arith.constant 0 : i32
    return %c0_i32, %c0_i32_0 : i32, i32
  }
  func.func @transform_1(%arg0: i32) -> (i32, i32) {
    %c0_i32 = arith.constant 0 : i32
    %c0_i32_0 = arith.constant 0 : i32
    %c0_i32_1 = arith.constant 0 : i32
    return %c0_i32, %c0_i32_0 : i32, i32
  }
  func.func @transform_2(%arg0: i32) -> (i32, i32, i32) {
    %c0_i32 = arith.constant 0 : i32
    %c0_i32_0 = arith.constant 0 : i32
    %c0_i32_1 = arith.constant 0 : i32
    %c0_i32_2 = arith.constant 0 : i32
    return %c0_i32, %c0_i32_0, %c0_i32_1 : i32, i32, i32
  }
  func.func @transform_3(%arg0: i32) -> (i32, i32, i32) {
    %c0_i32 = arith.constant 0 : i32
    %c0_i32_0 = arith.constant 0 : i32
    %c0_i32_1 = arith.constant 0 : i32
    %c0_i32_2 = arith.constant 0 : i32
    return %c0_i32, %c0_i32_0, %c0_i32_1 : i32, i32, i32
  }
  func.func @transform_4(%arg0: i32) -> (i32, i32) {
    %c0_i32 = arith.constant 0 : i32
    %c0_i32_0 = arith.constant 0 : i32
    %c0_i32_1 = arith.constant 0 : i32
    return %c0_i32, %c0_i32_0 : i32, i32
  }
  func.func @transform_5(%arg0: i32) -> (i32, i32) {
    %c0_i32 = arith.constant 0 : i32
    %c0_i32_0 = arith.constant 0 : i32
    %c0_i32_1 = arith.constant 0 : i32
    return %c0_i32, %c0_i32_0 : i32, i32
  }
}

</mosaic_0001>

<llo_original>
// kernel: weight_learning_forward.1
$region0: #{weight_learning_forward.1}
  #allocation0 [shape = 'u32[]', space=smem, size = 0x4, offset = 0x4, fixed_abs, tag = 'smem constant byte address 0x4 - core index']
  #allocation1 [shape = 'u32[144,128]{1,0:T(1,128)}', space=vmem, size = 0x12000, scoped, tag = 'internal scratch']
  %s0 = inlined_call_operand.vmem [shape: f32[128,72], index: 0, kind: input, shape index: {}]
  %s1 = inlined_call_operand.vmem [shape: f32[72,8], index: 1, kind: input, shape index: {}]
  %s2 = inlined_call_operand.vmem [shape: f32[9,2,128], index: 2, kind: input, shape index: {}]
  %s3 = inlined_call_operand.vmem [shape: f32[9,8,8], index: 3, kind: input, shape index: {}]
  %s4 = inlined_call_operand.vmem [shape: f32[1,8], index: 4, kind: input, shape index: {}]
  %s5 = inlined_call_operand.hbm [shape: f32[2,8], index: 5, kind: output, shape index: {}]
  %s6 = sld [smem:[#allocation0]]
  $region30: #{weight_learning_forward.1} parent=0
    _
  %s8 = ssub.s32 1, %s6
  %s9 = scalar_select 0, %s8, %s6
  $region1: #{weight_learning_forward.1} parent=0
    #allocation2 [shape = 'u8[1024]{0}', space=vmem, size = 0x400, scoped, tag = 'output window, operand 0, single buffered']
    #allocation3 [shape = 's32[1]{0}', space=sflag, size = 0x4, scoped, tag = 'scoped memory for weight_learning_forward.1']
    %10 = vsyncpa [#allocation3], 0
    // Predicated region
    $region2: #{weight_learning_forward.1} parent=1 // pred_check
      _
    $region3: #{weight_learning_forward.1} parent=1 // pred_check_branch
      %12 = sbr.rel (0) target = $region5
    $region4: #{weight_learning_forward.1} parent=1 // pred_region
      _
    $region5: #{weight_learning_forward.1} parent=1 // pred_fallthru
      _
    // Predicated region
    $region6: #{weight_learning_forward.1} parent=1 // pred_check
      _
    $region7: #{weight_learning_forward.1} parent=1 // pred_check_branch
      %14 = sbr.rel (0) target = $region9
    $region8: #{weight_learning_forward.1} parent=1 // pred_region
      _
    $region9: #{weight_learning_forward.1} parent=1 // pred_fallthru
      _
    // Predicated region
    $region10: #{weight_learning_forward.1} parent=1 // pred_check
      _
    $region11: #{weight_learning_forward.1} parent=1 // pred_check_branch
      %16 = sbr.rel (0) target = $region13
    $region12: #{weight_learning_forward.1} parent=1 // pred_region
      _
    $region13: #{weight_learning_forward.1} parent=1 // pred_fallthru
      _
    // Predicated region
    $region14: #{weight_learning_forward.1} parent=1 // pred_check
      _
    $region15: #{weight_learning_forward.1} parent=1 // pred_check_branch
      %18 = sbr.rel (0) target = $region17
    $region16: #{weight_learning_forward.1} parent=1 // pred_region
      _
    $region17: #{weight_learning_forward.1} parent=1 // pred_fallthru
      _
    // Predicated region
    $region18: #{weight_learning_forward.1} parent=1 // pred_check
      _
    $region19: #{weight_learning_forward.1} parent=1 // pred_check_branch
      %20 = sbr.rel (0) target = $region21
    $region20: #{weight_learning_forward.1} parent=1 // pred_region
      _
    $region21: #{weight_learning_forward.1} parent=1 // pred_fallthru
      _
    %v21 = vld [vmem:[%s0] sm:$0xff]
    %v22 = vld [vmem:[%s0 + $0x8] sm:$0xff]
    %v23 = vld [vmem:[%s0 + $0x10] sm:$0xff]
    %v24 = vld [vmem:[%s0 + $0x18] sm:$0xff]
    %v25 = vld [vmem:[%s0 + $0x20] sm:$0xff]
    %v26 = vld [vmem:[%s0 + $0x28] sm:$0xff]
    %v27 = vld [vmem:[%s0 + $0x30] sm:$0xff]
    %v28 = vld [vmem:[%s0 + $0x38] sm:$0xff]
    %v29 = vld [vmem:[%s0 + $0x40] sm:$0xff]
    %v30 = vld [vmem:[%s0 + $0x48] sm:$0xff]
    %v31 = vld [vmem:[%s0 + $0x50] sm:$0xff]
    %v32 = vld [vmem:[%s0 + $0x58] sm:$0xff]
    %v33 = vld [vmem:[%s0 + $0x60] sm:$0xff]
    %v34 = vld [vmem:[%s0 + $0x68] sm:$0xff]
    %v35 = vld [vmem:[%s0 + $0x70] sm:$0xff]
    %v36 = vld [vmem:[%s0 + $0x78] sm:$0xff]
    %v37 = vld [vmem:[%s1] sm:$0xff]
    %v38 = vld [vmem:[%s1 + $0x8] sm:$0xff]
    %v39 = vld [vmem:[%s1 + $0x10] sm:$0xff]
    %v40 = vld [vmem:[%s1 + $0x18] sm:$0xff]
    %v41 = vld [vmem:[%s1 + $0x20] sm:$0xff]
    %v42 = vld [vmem:[%s1 + $0x28] sm:$0xff]
    %v43 = vld [vmem:[%s1 + $0x30] sm:$0xff]
    %v44 = vld [vmem:[%s1 + $0x38] sm:$0xff]
    %v45 = vld [vmem:[%s1 + $0x40] sm:$0xff]
    %vm46 = vcmask 588800
    %v48 = vsel %vm46, %v21, 0
    %v51 = vsel %vm46, %v22, 0
    %v54 = vsel %vm46, %v23, 0
    %v57 = vsel %vm46, %v24, 0
    %v60 = vsel %vm46, %v25, 0
    %v63 = vsel %vm46, %v26, 0
    %v66 = vsel %vm46, %v27, 0
    %v69 = vsel %vm46, %v28, 0
    %v72 = vsel %vm46, %v29, 0
    %v75 = vsel %vm46, %v30, 0
    %v78 = vsel %vm46, %v31, 0
    %v81 = vsel %vm46, %v32, 0
    %v84 = vsel %vm46, %v33, 0
    %v87 = vsel %vm46, %v34, 0
    %v90 = vsel %vm46, %v35, 0
    %v93 = vsel %vm46, %v36, 0
    %95 = vmatprep.subr.mxu0 0.0
    %96 = vmatpush1.msra.mxu0 0.0
    %97 = vmatprep.subr.mxu0 0.0
    %98 = vmatpush1.msra.mxu0 0.0
    %99 = vmatprep.subr.mxu0 0.0
    %100 = vmatpush1.msra.mxu0 0.0
    %101 = vmatprep.subr.mxu0 0.0
    %102 = vmatpush1.msra.mxu0 0.0
    %103 = vmatprep.subr.mxu0 0.0
    %104 = vmatpush1.msra.mxu0 0.0
    %105 = vmatprep.subr.mxu0 0.0
    %106 = vmatpush1.msra.mxu0 0.0
    %107 = vmatprep.subr.mxu0 0.0
    %108 = vmatpush1.msra.mxu0 0.0
    %109 = vmatprep.subr.mxu0 0.0
    %110 = vmatpush1.msra.mxu0 %v45
    %111 = vmatprep.subr.mxu0 0.0
    %112 = vmatpush1.msra.mxu0 %v44
    %113 = vmatprep.subr.mxu0 0.0
    %114 = vmatpush1.msra.mxu0 %v43
    %115 = vmatprep.subr.mxu0 0.0
    %116 = vmatpush1.msra.mxu0 %v42
    %117 = vmatprep.subr.mxu0 0.0
    %118 = vmatpush1.msra.mxu0 %v41
    %119 = vmatprep.subr.mxu0 0.0
    %120 = vmatpush1.msra.mxu0 %v40
    %121 = vmatprep.subr.mxu0 0.0
    %122 = vmatpush1.msra.mxu0 %v39
    %123 = vmatprep.subr.mxu0 0.0
    %124 = vmatpush1.msra.mxu0 %v38
    %125 = vmatprep.subr.mxu0 0.0
    %126 = vmatpush1.msra.mxu0 %v37
    %127 = vmatprep.subr.mxu0 0.0
    %128 = vmatpush2.msra.mxu0 0.0
    %129 = vmatprep.subr.mxu0 0.0
    %130 = vmatpush2.msra.mxu0 0.0
    %131 = vmatprep.subr.mxu0 0.0
    %132 = vmatpush2.msra.mxu0 0.0
    %133 = vmatprep.subr.mxu0 0.0
    %134 = vmatpush2.msra.mxu0 0.0
    %135 = vmatprep.subr.mxu0 0.0
    %136 = vmatpush2.msra.mxu0 0.0
    %137 = vmatprep.subr.mxu0 0.0
    %138 = vmatpush2.msra.mxu0 0.0
    %139 = vmatprep.subr.mxu0 0.0
    %140 = vmatpush2.msra.mxu0 0.0
    %141 = vmatprep.subr.mxu0 0.0
    %142 = vmatpush2.msra.mxu0 0.0
    %143 = vmatprep.subr.mxu0 0.0
    %144 = vmatpush2.msra.mxu0 0.0
    %145 = vmatprep.subr.mxu0 0.0
    %146 = vmatpush2.msra.mxu0 0.0
    %147 = vmatprep.subr.mxu0 0.0
    %148 = vmatpush2.msra.mxu0 0.0
    %149 = vmatprep.subr.mxu0 0.0
    %150 = vmatpush2.msra.mxu0 0.0
    %151 = vmatprep.subr.mxu0 0.0
    %152 = vmatpush2.msra.mxu0 0.0
    %153 = vmatprep.subr.mxu0 0.0
    %154 = vmatpush2.msra.mxu0 0.0
    %155 = vmatprep.subr.mxu0 0.0
    %156 = vmatpush2.msra.mxu0 0.0
    %157 = vmatprep.subr.mxu0 0.0
    %158 = vmatpush2.msra.mxu0 0.0
    %159 = vmatprep.mubr.f32.mxu0 0.0
    %160 = vmatmul.mubr.f32.gmra.mxu0 %v48
    %v161 = vpop.f32.mrf.mxu0
    %v162 = vadd.f32 0.0, %v161
    %v163 = vpop.f32.mrf.mxu0
    %164 = vmatprep.mubr.f32.mxu0 0.0
    %165 = vmatmul.mubr.f32.gmra.mxu0 %v51
    %v166 = vpop.f32.mrf.mxu0
    %v167 = vadd.f32 0.0, %v166
    %v168 = vpop.f32.mrf.mxu0
    %169 = vmatprep.mubr.f32.mxu0 0.0
    %170 = vmatmul.mubr.f32.gmra.mxu0 %v54
    %v171 = vpop.f32.mrf.mxu0
    %v172 = vadd.f32 0.0, %v171
    %v173 = vpop.f32.mrf.mxu0
    %174 = vmatprep.mubr.f32.mxu0 0.0
    %175 = vmatmul.mubr.f32.gmra.mxu0 %v57
    %v176 = vpop.f32.mrf.mxu0
    %v177 = vadd.f32 0.0, %v176
    %v178 = vpop.f32.mrf.mxu0
    %179 = vmatprep.mubr.f32.mxu0 0.0
    %180 = vmatmul.mubr.f32.gmra.mxu0 %v60
    %v181 = vpop.f32.mrf.mxu0
    %v182 = vadd.f32 0.0, %v181
    %v183 = vpop.f32.mrf.mxu0
    %184 = vmatprep.mubr.f32.mxu0 0.0
    %185 = vmatmul.mubr.f32.gmra.mxu0 %v63
    %v186 = vpop.f32.mrf.mxu0
    %v187 = vadd.f32 0.0, %v186
    %v188 = vpop.f32.mrf.mxu0
    %189 = vmatprep.mubr.f32.mxu0 0.0
    %190 = vmatmul.mubr.f32.gmra.mxu0 %v66
    %v191 = vpop.f32.mrf.mxu0
    %v192 = vadd.f32 0.0, %v191
    %v193 = vpop.f32.mrf.mxu0
    %194 = vmatprep.mubr.f32.mxu0 0.0
    %195 = vmatmul.mubr.f32.gmra.mxu0 %v69
    %v196 = vpop.f32.mrf.mxu0
    %v197 = vadd.f32 0.0, %v196
    %v198 = vpop.f32.mrf.mxu0
    %199 = vmatprep.mubr.f32.mxu0 0.0
    %200 = vmatmul.mubr.f32.gmra.mxu0 %v72
    %v201 = vpop.f32.mrf.mxu0
    %v202 = vadd.f32 0.0, %v201
    %v203 = vpop.f32.mrf.mxu0
    %204 = vmatprep.mubr.f32.mxu0 0.0
    %205 = vmatmul.mubr.f32.gmra.mxu0 %v75
    %v206 = vpop.f32.mrf.mxu0
    %v207 = vadd.f32 0.0, %v206
    %v208 = vpop.f32.mrf.mxu0
    %209 = vmatprep.mubr.f32.mxu0 0.0
    %210 = vmatmul.mubr.f32.gmra.mxu0 %v78
    %v211 = vpop.f32.mrf.mxu0
    %v212 = vadd.f32 0.0, %v211
    %v213 = vpop.f32.mrf.mxu0
    %214 = vmatprep.mubr.f32.mxu0 0.0
    %215 = vmatmul.mubr.f32.gmra.mxu0 %v81
    %v216 = vpop.f32.mrf.mxu0
    %v217 = vadd.f32 0.0, %v216
    %v218 = vpop.f32.mrf.mxu0
    %219 = vmatprep.mubr.f32.mxu0 0.0
    %220 = vmatmul.mubr.f32.gmra.mxu0 %v84
    %v221 = vpop.f32.mrf.mxu0
    %v222 = vadd.f32 0.0, %v221
    %v223 = vpop.f32.mrf.mxu0
    %224 = vmatprep.mubr.f32.mxu0 0.0
    %225 = vmatmul.mubr.f32.gmra.mxu0 %v87
    %v226 = vpop.f32.mrf.mxu0
    %v227 = vadd.f32 0.0, %v226
    %v228 = vpop.f32.mrf.mxu0
    %229 = vmatprep.mubr.f32.mxu0 0.0
    %230 = vmatmul.mubr.f32.gmra.mxu0 %v90
    %v231 = vpop.f32.mrf.mxu0
    %v232 = vadd.f32 0.0, %v231
    %v233 = vpop.f32.mrf.mxu0
    %234 = vmatprep.mubr.f32.mxu0 0.0
    %235 = vmatmul.mubr.f32.gmra.mxu0 %v93
    %v236 = vpop.f32.mrf.mxu0
    %v237 = vadd.f32 0.0, %v236
    %v238 = vpop.f32.mrf.mxu0
    %239 = vdwg.mxu0
    %v240 = vld [vmem:[%s2] sm:$0x3]
    %241 = vmatprep.subr.mxu0 0.0
    %242 = vmatpush1.msra.mxu0 %v237
    %243 = vmatprep.subr.mxu0 0.0
    %244 = vmatpush1.msra.mxu0 %v232
    %245 = vmatprep.subr.mxu0 0.0
    %246 = vmatpush1.msra.mxu0 %v227
    %247 = vmatprep.subr.mxu0 0.0
    %248 = vmatpush1.msra.mxu0 %v222
    %249 = vmatprep.subr.mxu0 0.0
    %250 = vmatpush1.msra.mxu0 %v217
    %251 = vmatprep.subr.mxu0 0.0
    %252 = vmatpush1.msra.mxu0 %v212
    %253 = vmatprep.subr.mxu0 0.0
    %254 = vmatpush1.msra.mxu0 %v207
    %255 = vmatprep.subr.mxu0 0.0
    %256 = vmatpush1.msra.mxu0 %v202
    %257 = vmatprep.subr.mxu0 0.0
    %258 = vmatpush1.msra.mxu0 %v197
    %259 = vmatprep.subr.mxu0 0.0
    %260 = vmatpush1.msra.mxu0 %v192
    %261 = vmatprep.subr.mxu0 0.0
    %262 = vmatpush1.msra.mxu0 %v187
    %263 = vmatprep.subr.mxu0 0.0
    %264 = vmatpush1.msra.mxu0 %v182
    %265 = vmatprep.subr.mxu0 0.0
    %266 = vmatpush1.msra.mxu0 %v177
    %267 = vmatprep.subr.mxu0 0.0
    %268 = vmatpush1.msra.mxu0 %v172
    %269 = vmatprep.subr.mxu0 0.0
    %270 = vmatpush1.msra.mxu0 %v167
    %271 = vmatprep.subr.mxu0 0.0
    %272 = vmatpush1.msra.mxu0 %v162
    %273 = vmatprep.subr.mxu0 0.0
    %274 = vmatpush2.msra.mxu0 0.0
    %275 = vmatprep.subr.mxu0 0.0
    %276 = vmatpush2.msra.mxu0 0.0
    %277 = vmatprep.subr.mxu0 0.0
    %278 = vmatpush2.msra.mxu0 0.0
    %279 = vmatprep.subr.mxu0 0.0
    %280 = vmatpush2.msra.mxu0 0.0
    %281 = vmatprep.subr.mxu0 0.0
    %282 = vmatpush2.msra.mxu0 0.0
    %283 = vmatprep.subr.mxu0 0.0
    %284 = vmatpush2.msra.mxu0 0.0
    %285 = vmatprep.subr.mxu0 0.0
    %286 = vmatpush2.msra.mxu0 0.0
    %287 = vmatprep.subr.mxu0 0.0
    %288 = vmatpush2.msra.mxu0 0.0
    %289 = vmatprep.subr.mxu0 0.0
    %290 = vmatpush2.msra.mxu0 0.0
    %291 = vmatprep.subr.mxu0 0.0
    %292 = vmatpush2.msra.mxu0 0.0
    %293 = vmatprep.subr.mxu0 0.0
    %294 = vmatpush2.msra.mxu0 0.0
    %295 = vmatprep.subr.mxu0 0.0
    %296 = vmatpush2.msra.mxu0 0.0
    %297 = vmatprep.subr.mxu0 0.0
    %298 = vmatpush2.msra.mxu0 0.0
    %299 = vmatprep.subr.mxu0 0.0
    %300 = vmatpush2.msra.mxu0 0.0
    %301 = vmatprep.subr.mxu0 0.0
    %302 = vmatpush2.msra.mxu0 0.0
    %303 = vmatprep.subr.mxu0 0.0
    %304 = vmatpush2.msra.mxu0 0.0
    %305 = vmatprep.mubr.f32.mxu0 0.0
    %306 = vmatmul.mubr.f32.gmra.mxu0 %v240
    %v307 = vpop.f32.mrf.mxu0
    %v308 = vadd.f32 0.0, %v307
    %v309 = vpop.f32.mrf.mxu0
    %310 = vdwg.mxu0
    %v311 = vld [vmem:[%s3] sm:$0xff]
    %s312 = scalar_lea.vmem %s2, 2
    %v313 = vld [vmem:[%s312] sm:$0x3]
    %314 = vmatprep.subr.mxu0 0.0
    %315 = vmatpush1.msra.mxu0 %v237
    %316 = vmatprep.subr.mxu0 0.0
    %317 = vmatpush1.msra.mxu0 %v232
    %318 = vmatprep.subr.mxu0 0.0
    %319 = vmatpush1.msra.mxu0 %v227
    %320 = vmatprep.subr.mxu0 0.0
    %321 = vmatpush1.msra.mxu0 %v222
    %322 = vmatprep.subr.mxu0 0.0
    %323 = vmatpush1.msra.mxu0 %v217
    %324 = vmatprep.subr.mxu0 0.0
    %325 = vmatpush1.msra.mxu0 %v212
    %326 = vmatprep.subr.mxu0 0.0
    %327 = vmatpush1.msra.mxu0 %v207
    %328 = vmatprep.subr.mxu0 0.0
    %329 = vmatpush1.msra.mxu0 %v202
    %330 = vmatprep.subr.mxu0 0.0
    %331 = vmatpush1.msra.mxu0 %v197
    %332 = vmatprep.subr.mxu0 0.0
    %333 = vmatpush1.msra.mxu0 %v192
    %334 = vmatprep.subr.mxu0 0.0
    %335 = vmatpush1.msra.mxu0 %v187
    %336 = vmatprep.subr.mxu0 0.0
    %337 = vmatpush1.msra.mxu0 %v182
    %338 = vmatprep.subr.mxu0 0.0
    %339 = vmatpush1.msra.mxu0 %v177
    %340 = vmatprep.subr.mxu0 0.0
    %341 = vmatpush1.msra.mxu0 %v172
    %342 = vmatprep.subr.mxu0 0.0
    %343 = vmatpush1.msra.mxu0 %v167
    %344 = vmatprep.subr.mxu0 0.0
    %345 = vmatpush1.msra.mxu0 %v162
    %346 = vmatprep.subr.mxu0 0.0
    %347 = vmatpush2.msra.mxu0 0.0
    %348 = vmatprep.subr.mxu0 0.0
    %349 = vmatpush2.msra.mxu0 0.0
    %350 = vmatprep.subr.mxu0 0.0
    %351 = vmatpush2.msra.mxu0 0.0
    %352 = vmatprep.subr.mxu0 0.0
    %353 = vmatpush2.msra.mxu0 0.0
    %354 = vmatprep.subr.mxu0 0.0
    %355 = vmatpush2.msra.mxu0 0.0
    %356 = vmatprep.subr.mxu0 0.0
    %357 = vmatpush2.msra.mxu0 0.0
    %358 = vmatprep.subr.mxu0 0.0
    %359 = vmatpush2.msra.mxu0 0.0
    %360 = vmatprep.subr.mxu0 0.0
    %361 = vmatpush2.msra.mxu0 0.0
    %362 = vmatprep.subr.mxu0 0.0
    %363 = vmatpush2.msra.mxu0 0.0
    %364 = vmatprep.subr.mxu0 0.0
    %365 = vmatpush2.msra.mxu0 0.0
    %366 = vmatprep.subr.mxu0 0.0
    %367 = vmatpush2.msra.mxu0 0.0
    %368 = vmatprep.subr.mxu0 0.0
    %369 = vmatpush2.msra.mxu0 0.0
    %370 = vmatprep.subr.mxu0 0.0
    %371 = vmatpush2.msra.mxu0 0.0
    %372 = vmatprep.subr.mxu0 0.0
    %373 = vmatpush2.msra.mxu0 0.0
    %374 = vmatprep.subr.mxu0 0.0
    %375 = vmatpush2.msra.mxu0 0.0
    %376 = vmatprep.subr.mxu0 0.0
    %377 = vmatpush2.msra.mxu0 0.0
    %378 = vmatprep.mubr.f32.mxu0 0.0
    %379 = vmatmul.mubr.f32.gmra.mxu0 %v313
    %v380 = vpop.f32.mrf.mxu0
    %v381 = vadd.f32 0.0, %v380
    %v382 = vpop.f32.mrf.mxu0
    %383 = vdwg.mxu0
    %s384 = scalar_lea.vmem %s3, 8
    %v385 = vld [vmem:[%s384] sm:$0xff]
    %vm386 = vcmask 64512
    %v388 = vsel %vm386, %v381, 0
    %390 = vmatprep.subr.mxu0 0.0
    %391 = vmatpush1.msra.mxu0 0.0
    %392 = vmatprep.subr.mxu0 0.0
    %393 = vmatpush1.msra.mxu0 0.0
    %394 = vmatprep.subr.mxu0 0.0
    %395 = vmatpush1.msra.mxu0 0.0
    %396 = vmatprep.subr.mxu0 0.0
    %397 = vmatpush1.msra.mxu0 0.0
    %398 = vmatprep.subr.mxu0 0.0
    %399 = vmatpush1.msra.mxu0 0.0
    %400 = vmatprep.subr.mxu0 0.0
    %401 = vmatpush1.msra.mxu0 0.0
    %402 = vmatprep.subr.mxu0 0.0
    %403 = vmatpush1.msra.mxu0 0.0
    %404 = vmatprep.subr.mxu0 0.0
    %405 = vmatpush1.msra.mxu0 0.0
    %406 = vmatprep.subr.mxu0 0.0
    %407 = vmatpush1.msra.mxu0 0.0
    %408 = vmatprep.subr.mxu0 0.0
    %409 = vmatpush1.msra.mxu0 0.0
    %410 = vmatprep.subr.mxu0 0.0
    %411 = vmatpush1.msra.mxu0 0.0
    %412 = vmatprep.subr.mxu0 0.0
    %413 = vmatpush1.msra.mxu0 0.0
    %414 = vmatprep.subr.mxu0 0.0
    %415 = vmatpush1.msra.mxu0 0.0
    %416 = vmatprep.subr.mxu0 0.0
    %417 = vmatpush1.msra.mxu0 0.0
    %418 = vmatprep.subr.mxu0 0.0
    %419 = vmatpush1.msra.mxu0 0.0
    %420 = vmatprep.subr.mxu0 0.0
    %421 = vmatpush1.msra.mxu0 %v385
    %422 = vmatprep.subr.mxu0 0.0
    %423 = vmatpush2.msra.mxu0 0.0
    %424 = vmatprep.subr.mxu0 0.0
    %425 = vmatpush2.msra.mxu0 0.0
    %426 = vmatprep.subr.mxu0 0.0
    %427 = vmatpush2.msra.mxu0 0.0
    %428 = vmatprep.subr.mxu0 0.0
    %429 = vmatpush2.msra.mxu0 0.0
    %430 = vmatprep.subr.mxu0 0.0
    %431 = vmatpush2.msra.mxu0 0.0
    %432 = vmatprep.subr.mxu0 0.0
    %433 = vmatpush2.msra.mxu0 0.0
    %434 = vmatprep.subr.mxu0 0.0
    %435 = vmatpush2.msra.mxu0 0.0
    %436 = vmatprep.subr.mxu0 0.0
    %437 = vmatpush2.msra.mxu0 0.0
    %438 = vmatprep.subr.mxu0 0.0
    %439 = vmatpush2.msra.mxu0 0.0
    %440 = vmatprep.subr.mxu0 0.0
    %441 = vmatpush2.msra.mxu0 0.0
    %442 = vmatprep.subr.mxu0 0.0
    %443 = vmatpush2.msra.mxu0 0.0
    %444 = vmatprep.subr.mxu0 0.0
    %445 = vmatpush2.msra.mxu0 0.0
    %446 = vmatprep.subr.mxu0 0.0
    %447 = vmatpush2.msra.mxu0 0.0
    %448 = vmatprep.subr.mxu0 0.0
    %449 = vmatpush2.msra.mxu0 0.0
    %450 = vmatprep.subr.mxu0 0.0
    %451 = vmatpush2.msra.mxu0 0.0
    %452 = vmatprep.subr.mxu0 0.0
    %453 = vmatpush2.msra.mxu0 0.0
    %454 = vmatprep.mubr.f32.mxu0 0.0
    %455 = vmatmul.mubr.f32.gmra.mxu0 %v388
    %v456 = vpop.f32.mrf.mxu0
    %v457 = vadd.f32 0.0, %v456
    %v458 = vpop.f32.mrf.mxu0
    %459 = vdwg.mxu0
    %v461 = vsel %vm386, %v308, 0
    %463 = vmatprep.subr.mxu0 0.0
    %464 = vmatpush1.msra.mxu0 0.0
    %465 = vmatprep.subr.mxu0 0.0
    %466 = vmatpush1.msra.mxu0 0.0
    %467 = vmatprep.subr.mxu0 0.0
    %468 = vmatpush1.msra.mxu0 0.0
    %469 = vmatprep.subr.mxu0 0.0
    %470 = vmatpush1.msra.mxu0 0.0
    %471 = vmatprep.subr.mxu0 0.0
    %472 = vmatpush1.msra.mxu0 0.0
    %473 = vmatprep.subr.mxu0 0.0
    %474 = vmatpush1.msra.mxu0 0.0
    %475 = vmatprep.subr.mxu0 0.0
    %476 = vmatpush1.msra.mxu0 0.0
    %477 = vmatprep.subr.mxu0 0.0
    %478 = vmatpush1.msra.mxu0 0.0
    %479 = vmatprep.subr.mxu0 0.0
    %480 = vmatpush1.msra.mxu0 0.0
    %481 = vmatprep.subr.mxu0 0.0
    %482 = vmatpush1.msra.mxu0 0.0
    %483 = vmatprep.subr.mxu0 0.0
    %484 = vmatpush1.msra.mxu0 0.0
    %485 = vmatprep.subr.mxu0 0.0
    %486 = vmatpush1.msra.mxu0 0.0
    %487 = vmatprep.subr.mxu0 0.0
    %488 = vmatpush1.msra.mxu0 0.0
    %489 = vmatprep.subr.mxu0 0.0
    %490 = vmatpush1.msra.mxu0 0.0
    %491 = vmatprep.subr.mxu0 0.0
    %492 = vmatpush1.msra.mxu0 0.0
    %493 = vmatprep.subr.mxu0 0.0
    %494 = vmatpush1.msra.mxu0 %v311
    %495 = vmatprep.subr.mxu0 0.0
    %496 = vmatpush2.msra.mxu0 0.0
    %497 = vmatprep.subr.mxu0 0.0
    %498 = vmatpush2.msra.mxu0 0.0
    %499 = vmatprep.subr.mxu0 0.0
    %500 = vmatpush2.msra.mxu0 0.0
    %501 = vmatprep.subr.mxu0 0.0
    %502 = vmatpush2.msra.mxu0 0.0
    %503 = vmatprep.subr.mxu0 0.0
    %504 = vmatpush2.msra.mxu0 0.0
    %505 = vmatprep.subr.mxu0 0.0
    %506 = vmatpush2.msra.mxu0 0.0
    %507 = vmatprep.subr.mxu0 0.0
    %508 = vmatpush2.msra.mxu0 0.0
    %509 = vmatprep.subr.mxu0 0.0
    %510 = vmatpush2.msra.mxu0 0.0
    %511 = vmatprep.subr.mxu0 0.0
    %512 = vmatpush2.msra.mxu0 0.0
    %513 = vmatprep.subr.mxu0 0.0
    %514 = vmatpush2.msra.mxu0 0.0
    %515 = vmatprep.subr.mxu0 0.0
    %516 = vmatpush2.msra.mxu0 0.0
    %517 = vmatprep.subr.mxu0 0.0
    %518 = vmatpush2.msra.mxu0 0.0
    %519 = vmatprep.subr.mxu0 0.0
    %520 = vmatpush2.msra.mxu0 0.0
    %521 = vmatprep.subr.mxu0 0.0
    %522 = vmatpush2.msra.mxu0 0.0
    %523 = vmatprep.subr.mxu0 0.0
    %524 = vmatpush2.msra.mxu0 0.0
    %525 = vmatprep.subr.mxu0 0.0
    %526 = vmatpush2.msra.mxu0 0.0
    %527 = vmatprep.mubr.f32.mxu0 0.0
    %528 = vmatmul.mubr.f32.gmra.mxu0 %v461
    %v529 = vpop.f32.mrf.mxu0
    %v530 = vadd.f32 %v457, %v529
    %v531 = vpop.f32.mrf.mxu0
    %532 = vdwg.mxu0
    %s533 = scalar_lea.vmem %s2, 4
    %v534 = vld [vmem:[%s533] sm:$0x3]
    %535 = vmatprep.subr.mxu0 0.0
    %536 = vmatpush1.msra.mxu0 %v237
    %537 = vmatprep.subr.mxu0 0.0
    %538 = vmatpush1.msra.mxu0 %v232
    %539 = vmatprep.subr.mxu0 0.0
    %540 = vmatpush1.msra.mxu0 %v227
    %541 = vmatprep.subr.mxu0 0.0
    %542 = vmatpush1.msra.mxu0 %v222
    %543 = vmatprep.subr.mxu0 0.0
    %544 = vmatpush1.msra.mxu0 %v217
    %545 = vmatprep.subr.mxu0 0.0
    %546 = vmatpush1.msra.mxu0 %v212
    %547 = vmatprep.subr.mxu0 0.0
    %548 = vmatpush1.msra.mxu0 %v207
    %549 = vmatprep.subr.mxu0 0.0
    %550 = vmatpush1.msra.mxu0 %v202
    %551 = vmatprep.subr.mxu0 0.0
    %552 = vmatpush1.msra.mxu0 %v197
    %553 = vmatprep.subr.mxu0 0.0
    %554 = vmatpush1.msra.mxu0 %v192
    %555 = vmatprep.subr.mxu0 0.0
    %556 = vmatpush1.msra.mxu0 %v187
    %557 = vmatprep.subr.mxu0 0.0
    %558 = vmatpush1.msra.mxu0 %v182
    %559 = vmatprep.subr.mxu0 0.0
    %560 = vmatpush1.msra.mxu0 %v177
    %561 = vmatprep.subr.mxu0 0.0
    %562 = vmatpush1.msra.mxu0 %v172
    %563 = vmatprep.subr.mxu0 0.0
    %564 = vmatpush1.msra.mxu0 %v167
    %565 = vmatprep.subr.mxu0 0.0
    %566 = vmatpush1.msra.mxu0 %v162
    %567 = vmatprep.subr.mxu0 0.0
    %568 = vmatpush2.msra.mxu0 0.0
    %569 = vmatprep.subr.mxu0 0.0
    %570 = vmatpush2.msra.mxu0 0.0
    %571 = vmatprep.subr.mxu0 0.0
    %572 = vmatpush2.msra.mxu0 0.0
    %573 = vmatprep.subr.mxu0 0.0
    %574 = vmatpush2.msra.mxu0 0.0
    %575 = vmatprep.subr.mxu0 0.0
    %576 = vmatpush2.msra.mxu0 0.0
    %577 = vmatprep.subr.mxu0 0.0
    %578 = vmatpush2.msra.mxu0 0.0
    %579 = vmatprep.subr.mxu0 0.0
    %580 = vmatpush2.msra.mxu0 0.0
    %581 = vmatprep.subr.mxu0 0.0
    %582 = vmatpush2.msra.mxu0 0.0
    %583 = vmatprep.subr.mxu0 0.0
    %584 = vmatpush2.msra.mxu0 0.0
    %585 = vmatprep.subr.mxu0 0.0
    %586 = vmatpush2.msra.mxu0 0.0
    %587 = vmatprep.subr.mxu0 0.0
    %588 = vmatpush2.msra.mxu0 0.0
    %589 = vmatprep.subr.mxu0 0.0
    %590 = vmatpush2.msra.mxu0 0.0
    %591 = vmatprep.subr.mxu0 0.0
    %592 = vmatpush2.msra.mxu0 0.0
    %593 = vmatprep.subr.mxu0 0.0
    %594 = vmatpush2.msra.mxu0 0.0
    %595 = vmatprep.subr.mxu0 0.0
    %596 = vmatpush2.msra.mxu0 0.0
    %597 = vmatprep.subr.mxu0 0.0
    %598 = vmatpush2.msra.mxu0 0.0
    %599 = vmatprep.mubr.f32.mxu0 0.0
    %600 = vmatmul.mubr.f32.gmra.mxu0 %v534
    %v601 = vpop.f32.mrf.mxu0
    %v602 = vadd.f32 0.0, %v601
    %v603 = vpop.f32.mrf.mxu0
    %604 = vdwg.mxu0
    %s605 = scalar_lea.vmem %s3, 16
    %v606 = vld [vmem:[%s605] sm:$0xff]
    %v608 = vsel %vm386, %v602, 0
    %610 = vmatprep.subr.mxu0 0.0
    %611 = vmatpush1.msra.mxu0 0.0
    %612 = vmatprep.subr.mxu0 0.0
    %613 = vmatpush1.msra.mxu0 0.0
    %614 = vmatprep.subr.mxu0 0.0
    %615 = vmatpush1.msra.mxu0 0.0
    %616 = vmatprep.subr.mxu0 0.0
    %617 = vmatpush1.msra.mxu0 0.0
    %618 = vmatprep.subr.mxu0 0.0
    %619 = vmatpush1.msra.mxu0 0.0
    %620 = vmatprep.subr.mxu0 0.0
    %621 = vmatpush1.msra.mxu0 0.0
    %622 = vmatprep.subr.mxu0 0.0
    %623 = vmatpush1.msra.mxu0 0.0
    %624 = vmatprep.subr.mxu0 0.0
    %625 = vmatpush1.msra.mxu0 0.0
    %626 = vmatprep.subr.mxu0 0.0
    %627 = vmatpush1.msra.mxu0 0.0
    %628 = vmatprep.subr.mxu0 0.0
    %629 = vmatpush1.msra.mxu0 0.0
    %630 = vmatprep.subr.mxu0 0.0
    %631 = vmatpush1.msra.mxu0 0.0
    %632 = vmatprep.subr.mxu0 0.0
    %633 = vmatpush1.msra.mxu0 0.0
    %634 = vmatprep.subr.mxu0 0.0
    %635 = vmatpush1.msra.mxu0 0.0
    %636 = vmatprep.subr.mxu0 0.0
    %637 = vmatpush1.msra.mxu0 0.0
    %638 = vmatprep.subr.mxu0 0.0
    %639 = vmatpush1.msra.mxu0 0.0
    %640 = vmatprep.subr.mxu0 0.0
    %641 = vmatpush1.msra.mxu0 %v606
    %642 = vmatprep.subr.mxu0 0.0
    %643 = vmatpush2.msra.mxu0 0.0
    %644 = vmatprep.subr.mxu0 0.0
    %645 = vmatpush2.msra.mxu0 0.0
    %646 = vmatprep.subr.mxu0 0.0
    %647 = vmatpush2.msra.mxu0 0.0
    %648 = vmatprep.subr.mxu0 0.0
    %649 = vmatpush2.msra.mxu0 0.0
    %650 = vmatprep.subr.mxu0 0.0
    %651 = vmatpush2.msra.mxu0 0.0
    %652 = vmatprep.subr.mxu0 0.0
    %653 = vmatpush2.msra.mxu0 0.0
    %654 = vmatprep.subr.mxu0 0.0
    %655 = vmatpush2.msra.mxu0 0.0
    %656 = vmatprep.subr.mxu0 0.0
    %657 = vmatpush2.msra.mxu0 0.0
    %658 = vmatprep.subr.mxu0 0.0
    %659 = vmatpush2.msra.mxu0 0.0
    %660 = vmatprep.subr.mxu0 0.0
    %661 = vmatpush2.msra.mxu0 0.0
    %662 = vmatprep.subr.mxu0 0.0
    %663 = vmatpush2.msra.mxu0 0.0
    %664 = vmatprep.subr.mxu0 0.0
    %665 = vmatpush2.msra.mxu0 0.0
    %666 = vmatprep.subr.mxu0 0.0
    %667 = vmatpush2.msra.mxu0 0.0
    %668 = vmatprep.subr.mxu0 0.0
    %669 = vmatpush2.msra.mxu0 0.0
    %670 = vmatprep.subr.mxu0 0.0
    %671 = vmatpush2.msra.mxu0 0.0
    %672 = vmatprep.subr.mxu0 0.0
    %673 = vmatpush2.msra.mxu0 0.0
    %674 = vmatprep.mubr.f32.mxu0 0.0
    %675 = vmatmul.mubr.f32.gmra.mxu0 %v608
    %v676 = vpop.f32.mrf.mxu0
    %v677 = vadd.f32 0.0, %v676
    %v678 = vpop.f32.mrf.mxu0
    %679 = vdwg.mxu0
    %v680 = vadd.f32 %v530, %v677
    %s681 = scalar_lea.vmem %s2, 6
    %v682 = vld [vmem:[%s681] sm:$0x3]
    %683 = vmatprep.subr.mxu0 0.0
    %684 = vmatpush1.msra.mxu0 %v237
    %685 = vmatprep.subr.mxu0 0.0
    %686 = vmatpush1.msra.mxu0 %v232
    %687 = vmatprep.subr.mxu0 0.0
    %688 = vmatpush1.msra.mxu0 %v227
    %689 = vmatprep.subr.mxu0 0.0
    %690 = vmatpush1.msra.mxu0 %v222
    %691 = vmatprep.subr.mxu0 0.0
    %692 = vmatpush1.msra.mxu0 %v217
    %693 = vmatprep.subr.mxu0 0.0
    %694 = vmatpush1.msra.mxu0 %v212
    %695 = vmatprep.subr.mxu0 0.0
    %696 = vmatpush1.msra.mxu0 %v207
    %697 = vmatprep.subr.mxu0 0.0
    %698 = vmatpush1.msra.mxu0 %v202
    %699 = vmatprep.subr.mxu0 0.0
    %700 = vmatpush1.msra.mxu0 %v197
    %701 = vmatprep.subr.mxu0 0.0
    %702 = vmatpush1.msra.mxu0 %v192
    %703 = vmatprep.subr.mxu0 0.0
    %704 = vmatpush1.msra.mxu0 %v187
    %705 = vmatprep.subr.mxu0 0.0
    %706 = vmatpush1.msra.mxu0 %v182
    %707 = vmatprep.subr.mxu0 0.0
    %708 = vmatpush1.msra.mxu0 %v177
    %709 = vmatprep.subr.mxu0 0.0
    %710 = vmatpush1.msra.mxu0 %v172
    %711 = vmatprep.subr.mxu0 0.0
    %712 = vmatpush1.msra.mxu0 %v167
    %713 = vmatprep.subr.mxu0 0.0
    %714 = vmatpush1.msra.mxu0 %v162
    %715 = vmatprep.subr.mxu0 0.0
    %716 = vmatpush2.msra.mxu0 0.0
    %717 = vmatprep.subr.mxu0 0.0
    %718 = vmatpush2.msra.mxu0 0.0
    %719 = vmatprep.subr.mxu0 0.0
    %720 = vmatpush2.msra.mxu0 0.0
    %721 = vmatprep.subr.mxu0 0.0
    %722 = vmatpush2.msra.mxu0 0.0
    %723 = vmatprep.subr.mxu0 0.0
    %724 = vmatpush2.msra.mxu0 0.0
    %725 = vmatprep.subr.mxu0 0.0
    %726 = vmatpush2.msra.mxu0 0.0
    %727 = vmatprep.subr.mxu0 0.0
    %728 = vmatpush2.msra.mxu0 0.0
    %729 = vmatprep.subr.mxu0 0.0
    %730 = vmatpush2.msra.mxu0 0.0
    %731 = vmatprep.subr.mxu0 0.0
    %732 = vmatpush2.msra.mxu0 0.0
    %733 = vmatprep.subr.mxu0 0.0
    %734 = vmatpush2.msra.mxu0 0.0
    %735 = vmatprep.subr.mxu0 0.0
    %736 = vmatpush2.msra.mxu0 0.0
    %737 = vmatprep.subr.mxu0 0.0
    %738 = vmatpush2.msra.mxu0 0.0
    %739 = vmatprep.subr.mxu0 0.0
    %740 = vmatpush2.msra.mxu0 0.0
    %741 = vmatprep.subr.mxu0 0.0
    %742 = vmatpush2.msra.mxu0 0.0
    %743 = vmatprep.subr.mxu0 0.0
    %744 = vmatpush2.msra.mxu0 0.0
    %745 = vmatprep.subr.mxu0 0.0
    %746 = vmatpush2.msra.mxu0 0.0
    %747 = vmatprep.mubr.f32.mxu0 0.0
    %748 = vmatmul.mubr.f32.gmra.mxu0 %v682
    %v749 = vpop.f32.mrf.mxu0
    %v750 = vadd.f32 0.0, %v749
    %v751 = vpop.f32.mrf.mxu0
    %752 = vdwg.mxu0
    %s753 = scalar_lea.vmem %s3, 24
    %v754 = vld [vmem:[%s753] sm:$0xff]
    %v756 = vsel %vm386, %v750, 0
    %758 = vmatprep.subr.mxu0 0.0
    %759 = vmatpush1.msra.mxu0 0.0
    %760 = vmatprep.subr.mxu0 0.0
    %761 = vmatpush1.msra.mxu0 0.0
    %762 = vmatprep.subr.mxu0 0.0
    %763 = vmatpush1.msra.mxu0 0.0
    %764 = vmatprep.subr.mxu0 0.0
    %765 = vmatpush1.msra.mxu0 0.0
    %766 = vmatprep.subr.mxu0 0.0
    %767 = vmatpush1.msra.mxu0 0.0
    %768 = vmatprep.subr.mxu0 0.0
    %769 = vmatpush1.msra.mxu0 0.0
    %770 = vmatprep.subr.mxu0 0.0
    %771 = vmatpush1.msra.mxu0 0.0
    %772 = vmatprep.subr.mxu0 0.0
    %773 = vmatpush1.msra.mxu0 0.0
    %774 = vmatprep.subr.mxu0 0.0
    %775 = vmatpush1.msra.mxu0 0.0
    %776 = vmatprep.subr.mxu0 0.0
    %777 = vmatpush1.msra.mxu0 0.0
    %778 = vmatprep.subr.mxu0 0.0
    %779 = vmatpush1.msra.mxu0 0.0
    %780 = vmatprep.subr.mxu0 0.0
    %781 = vmatpush1.msra.mxu0 0.0
    %782 = vmatprep.subr.mxu0 0.0
    %783 = vmatpush1.msra.mxu0 0.0
    %784 = vmatprep.subr.mxu0 0.0
    %785 = vmatpush1.msra.mxu0 0.0
    %786 = vmatprep.subr.mxu0 0.0
    %787 = vmatpush1.msra.mxu0 0.0
    %788 = vmatprep.subr.mxu0 0.0
    %789 = vmatpush1.msra.mxu0 %v754
    %790 = vmatprep.subr.mxu0 0.0
    %791 = vmatpush2.msra.mxu0 0.0
    %792 = vmatprep.subr.mxu0 0.0
    %793 = vmatpush2.msra.mxu0 0.0
    %794 = vmatprep.subr.mxu0 0.0
    %795 = vmatpush2.msra.mxu0 0.0
    %796 = vmatprep.subr.mxu0 0.0
    %797 = vmatpush2.msra.mxu0 0.0
    %798 = vmatprep.subr.mxu0 0.0
    %799 = vmatpush2.msra.mxu0 0.0
    %800 = vmatprep.subr.mxu0 0.0
    %801 = vmatpush2.msra.mxu0 0.0
    %802 = vmatprep.subr.mxu0 0.0
    %803 = vmatpush2.msra.mxu0 0.0
    %804 = vmatprep.subr.mxu0 0.0
    %805 = vmatpush2.msra.mxu0 0.0
    %806 = vmatprep.subr.mxu0 0.0
    %807 = vmatpush2.msra.mxu0 0.0
    %808 = vmatprep.subr.mxu0 0.0
    %809 = vmatpush2.msra.mxu0 0.0
    %810 = vmatprep.subr.mxu0 0.0
    %811 = vmatpush2.msra.mxu0 0.0
    %812 = vmatprep.subr.mxu0 0.0
    %813 = vmatpush2.msra.mxu0 0.0
    %814 = vmatprep.subr.mxu0 0.0
    %815 = vmatpush2.msra.mxu0 0.0
    %816 = vmatprep.subr.mxu0 0.0
    %817 = vmatpush2.msra.mxu0 0.0
    %818 = vmatprep.subr.mxu0 0.0
    %819 = vmatpush2.msra.mxu0 0.0
    %820 = vmatprep.subr.mxu0 0.0
    %821 = vmatpush2.msra.mxu0 0.0
    %822 = vmatprep.mubr.f32.mxu0 0.0
    %823 = vmatmul.mubr.f32.gmra.mxu0 %v756
    %v824 = vpop.f32.mrf.mxu0
    %v825 = vadd.f32 0.0, %v824
    %v826 = vpop.f32.mrf.mxu0
    %827 = vdwg.mxu0
    %v828 = vadd.f32 %v680, %v825
    %s829 = scalar_lea.vmem %s2, 8
    %v830 = vld [vmem:[%s829] sm:$0x3]
    %831 = vmatprep.subr.mxu0 0.0
    %832 = vmatpush1.msra.mxu0 %v237
    %833 = vmatprep.subr.mxu0 0.0
    %834 = vmatpush1.msra.mxu0 %v232
    %835 = vmatprep.subr.mxu0 0.0
    %836 = vmatpush1.msra.mxu0 %v227
    %837 = vmatprep.subr.mxu0 0.0
    %838 = vmatpush1.msra.mxu0 %v222
    %839 = vmatprep.subr.mxu0 0.0
    %840 = vmatpush1.msra.mxu0 %v217
    %841 = vmatprep.subr.mxu0 0.0
    %842 = vmatpush1.msra.mxu0 %v212
    %843 = vmatprep.subr.mxu0 0.0
    %844 = vmatpush1.msra.mxu0 %v207
    %845 = vmatprep.subr.mxu0 0.0
    %846 = vmatpush1.msra.mxu0 %v202
    %847 = vmatprep.subr.mxu0 0.0
    %848 = vmatpush1.msra.mxu0 %v197
    %849 = vmatprep.subr.mxu0 0.0
    %850 = vmatpush1.msra.mxu0 %v192
    %851 = vmatprep.subr.mxu0 0.0
    %852 = vmatpush1.msra.mxu0 %v187
    %853 = vmatprep.subr.mxu0 0.0
    %854 = vmatpush1.msra.mxu0 %v182
    %855 = vmatprep.subr.mxu0 0.0
    %856 = vmatpush1.msra.mxu0 %v177
    %857 = vmatprep.subr.mxu0 0.0
    %858 = vmatpush1.msra.mxu0 %v172
    %859 = vmatprep.subr.mxu0 0.0
    %860 = vmatpush1.msra.mxu0 %v167
    %861 = vmatprep.subr.mxu0 0.0
    %862 = vmatpush1.msra.mxu0 %v162
    %863 = vmatprep.subr.mxu0 0.0
    %864 = vmatpush2.msra.mxu0 0.0
    %865 = vmatprep.subr.mxu0 0.0
    %866 = vmatpush2.msra.mxu0 0.0
    %867 = vmatprep.subr.mxu0 0.0
    %868 = vmatpush2.msra.mxu0 0.0
    %869 = vmatprep.subr.mxu0 0.0
    %870 = vmatpush2.msra.mxu0 0.0
    %871 = vmatprep.subr.mxu0 0.0
    %872 = vmatpush2.msra.mxu0 0.0
    %873 = vmatprep.subr.mxu0 0.0
    %874 = vmatpush2.msra.mxu0 0.0
    %875 = vmatprep.subr.mxu0 0.0
    %876 = vmatpush2.msra.mxu0 0.0
    %877 = vmatprep.subr.mxu0 0.0
    %878 = vmatpush2.msra.mxu0 0.0
    %879 = vmatprep.subr.mxu0 0.0
    %880 = vmatpush2.msra.mxu0 0.0
    %881 = vmatprep.subr.mxu0 0.0
    %882 = vmatpush2.msra.mxu0 0.0
    %883 = vmatprep.subr.mxu0 0.0
    %884 = vmatpush2.msra.mxu0 0.0
    %885 = vmatprep.subr.mxu0 0.0
    %886 = vmatpush2.msra.mxu0 0.0
    %887 = vmatprep.subr.mxu0 0.0
    %888 = vmatpush2.msra.mxu0 0.0
    %889 = vmatprep.subr.mxu0 0.0
    %890 = vmatpush2.msra.mxu0 0.0
    %891 = vmatprep.subr.mxu0 0.0
    %892 = vmatpush2.msra.mxu0 0.0
    %893 = vmatprep.subr.mxu0 0.0
    %894 = vmatpush2.msra.mxu0 0.0
    %895 = vmatprep.mubr.f32.mxu0 0.0
    %896 = vmatmul.mubr.f32.gmra.mxu0 %v830
    %v897 = vpop.f32.mrf.mxu0
    %v898 = vadd.f32 0.0, %v897
    %v899 = vpop.f32.mrf.mxu0
    %900 = vdwg.mxu0
    %s901 = scalar_lea.vmem %s3, 32
    %v902 = vld [vmem:[%s901] sm:$0xff]
    %v904 = vsel %vm386, %v898, 0
    %906 = vmatprep.subr.mxu0 0.0
    %907 = vmatpush1.msra.mxu0 0.0
    %908 = vmatprep.subr.mxu0 0.0
    %909 = vmatpush1.msra.mxu0 0.0
    %910 = vmatprep.subr.mxu0 0.0
    %911 = vmatpush1.msra.mxu0 0.0
    %912 = vmatprep.subr.mxu0 0.0
    %913 = vmatpush1.msra.mxu0 0.0
    %914 = vmatprep.subr.mxu0 0.0
    %915 = vmatpush1.msra.mxu0 0.0
    %916 = vmatprep.subr.mxu0 0.0
    %917 = vmatpush1.msra.mxu0 0.0
    %918 = vmatprep.subr.mxu0 0.0
    %919 = vmatpush1.msra.mxu0 0.0
    %920 = vmatprep.subr.mxu0 0.0
    %921 = vmatpush1.msra.mxu0 0.0
    %922 = vmatprep.subr.mxu0 0.0
    %923 = vmatpush1.msra.mxu0 0.0
    %924 = vmatprep.subr.mxu0 0.0
    %925 = vmatpush1.msra.mxu0 0.0
    %926 = vmatprep.subr.mxu0 0.0
    %927 = vmatpush1.msra.mxu0 0.0
    %928 = vmatprep.subr.mxu0 0.0
    %929 = vmatpush1.msra.mxu0 0.0
    %930 = vmatprep.subr.mxu0 0.0
    %931 = vmatpush1.msra.mxu0 0.0
    %932 = vmatprep.subr.mxu0 0.0
    %933 = vmatpush1.msra.mxu0 0.0
    %934 = vmatprep.subr.mxu0 0.0
    %935 = vmatpush1.msra.mxu0 0.0
    %936 = vmatprep.subr.mxu0 0.0
    %937 = vmatpush1.msra.mxu0 %v902
    %938 = vmatprep.subr.mxu0 0.0
    %939 = vmatpush2.msra.mxu0 0.0
    %940 = vmatprep.subr.mxu0 0.0
    %941 = vmatpush2.msra.mxu0 0.0
    %942 = vmatprep.subr.mxu0 0.0
    %943 = vmatpush2.msra.mxu0 0.0
    %944 = vmatprep.subr.mxu0 0.0
    %945 = vmatpush2.msra.mxu0 0.0
    %946 = vmatprep.subr.mxu0 0.0
    %947 = vmatpush2.msra.mxu0 0.0
    %948 = vmatprep.subr.mxu0 0.0
    %949 = vmatpush2.msra.mxu0 0.0
    %950 = vmatprep.subr.mxu0 0.0
    %951 = vmatpush2.msra.mxu0 0.0
    %952 = vmatprep.subr.mxu0 0.0
    %953 = vmatpush2.msra.mxu0 0.0
    %954 = vmatprep.subr.mxu0 0.0
    %955 = vmatpush2.msra.mxu0 0.0
    %956 = vmatprep.subr.mxu0 0.0
    %957 = vmatpush2.msra.mxu0 0.0
    %958 = vmatprep.subr.mxu0 0.0
    %959 = vmatpush2.msra.mxu0 0.0
    %960 = vmatprep.subr.mxu0 0.0
    %961 = vmatpush2.msra.mxu0 0.0
    %962 = vmatprep.subr.mxu0 0.0
    %963 = vmatpush2.msra.mxu0 0.0
    %964 = vmatprep.subr.mxu0 0.0
    %965 = vmatpush2.msra.mxu0 0.0
    %966 = vmatprep.subr.mxu0 0.0
    %967 = vmatpush2.msra.mxu0 0.0
    %968 = vmatprep.subr.mxu0 0.0
    %969 = vmatpush2.msra.mxu0 0.0
    %970 = vmatprep.mubr.f32.mxu0 0.0
    %971 = vmatmul.mubr.f32.gmra.mxu0 %v904
    %v972 = vpop.f32.mrf.mxu0
    %v973 = vadd.f32 0.0, %v972
    %v974 = vpop.f32.mrf.mxu0
    %975 = vdwg.mxu0
    %v976 = vadd.f32 %v828, %v973
    %s977 = scalar_lea.vmem %s2, 10
    %v978 = vld [vmem:[%s977] sm:$0x3]
    %979 = vmatprep.subr.mxu0 0.0
    %980 = vmatpush1.msra.mxu0 %v237
    %981 = vmatprep.subr.mxu0 0.0
    %982 = vmatpush1.msra.mxu0 %v232
    %983 = vmatprep.subr.mxu0 0.0
    %984 = vmatpush1.msra.mxu0 %v227
    %985 = vmatprep.subr.mxu0 0.0
    %986 = vmatpush1.msra.mxu0 %v222
    %987 = vmatprep.subr.mxu0 0.0
    %988 = vmatpush1.msra.mxu0 %v217
    %989 = vmatprep.subr.mxu0 0.0
    %990 = vmatpush1.msra.mxu0 %v212
    %991 = vmatprep.subr.mxu0 0.0
    %992 = vmatpush1.msra.mxu0 %v207
    %993 = vmatprep.subr.mxu0 0.0
    %994 = vmatpush1.msra.mxu0 %v202
    %995 = vmatprep.subr.mxu0 0.0
    %996 = vmatpush1.msra.mxu0 %v197
    %997 = vmatprep.subr.mxu0 0.0
    %998 = vmatpush1.msra.mxu0 %v192
    %999 = vmatprep.subr.mxu0 0.0
    %1000 = vmatpush1.msra.mxu0 %v187
    %1001 = vmatprep.subr.mxu0 0.0
    %1002 = vmatpush1.msra.mxu0 %v182
    %1003 = vmatprep.subr.mxu0 0.0
    %1004 = vmatpush1.msra.mxu0 %v177
    %1005 = vmatprep.subr.mxu0 0.0
    %1006 = vmatpush1.msra.mxu0 %v172
    %1007 = vmatprep.subr.mxu0 0.0
    %1008 = vmatpush1.msra.mxu0 %v167
    %1009 = vmatprep.subr.mxu0 0.0
    %1010 = vmatpush1.msra.mxu0 %v162
    %1011 = vmatprep.subr.mxu0 0.0
    %1012 = vmatpush2.msra.mxu0 0.0
    %1013 = vmatprep.subr.mxu0 0.0
    %1014 = vmatpush2.msra.mxu0 0.0
    %1015 = vmatprep.subr.mxu0 0.0
    %1016 = vmatpush2.msra.mxu0 0.0
    %1017 = vmatprep.subr.mxu0 0.0
    %1018 = vmatpush2.msra.mxu0 0.0
    %1019 = vmatprep.subr.mxu0 0.0
    %1020 = vmatpush2.msra.mxu0 0.0
    %1021 = vmatprep.subr.mxu0 0.0
    %1022 = vmatpush2.msra.mxu0 0.0
    %1023 = vmatprep.subr.mxu0 0.0
    %1024 = vmatpush2.msra.mxu0 0.0
    %1025 = vmatprep.subr.mxu0 0.0
    %1026 = vmatpush2.msra.mxu0 0.0
    %1027 = vmatprep.subr.mxu0 0.0
    %1028 = vmatpush2.msra.mxu0 0.0
    %1029 = vmatprep.subr.mxu0 0.0
    %1030 = vmatpush2.msra.mxu0 0.0
    %1031 = vmatprep.subr.mxu0 0.0
    %1032 = vmatpush2.msra.mxu0 0.0
    %1033 = vmatprep.subr.mxu0 0.0
    %1034 = vmatpush2.msra.mxu0 0.0
    %1035 = vmatprep.subr.mxu0 0.0
    %1036 = vmatpush2.msra.mxu0 0.0
    %1037 = vmatprep.subr.mxu0 0.0
    %1038 = vmatpush2.msra.mxu0 0.0
    %1039 = vmatprep.subr.mxu0 0.0
    %1040 = vmatpush2.msra.mxu0 0.0
    %1041 = vmatprep.subr.mxu0 0.0
    %1042 = vmatpush2.msra.mxu0 0.0
    %1043 = vmatprep.mubr.f32.mxu0 0.0
    %1044 = vmatmul.mubr.f32.gmra.mxu0 %v978
    %v1045 = vpop.f32.mrf.mxu0
    %v1046 = vadd.f32 0.0, %v1045
    %v1047 = vpop.f32.mrf.mxu0
    %1048 = vdwg.mxu0
    %s1049 = scalar_lea.vmem %s3, 40
    %v1050 = vld [vmem:[%s1049] sm:$0xff]
    %v1052 = vsel %vm386, %v1046, 0
    %1054 = vmatprep.subr.mxu0 0.0
    %1055 = vmatpush1.msra.mxu0 0.0
    %1056 = vmatprep.subr.mxu0 0.0
    %1057 = vmatpush1.msra.mxu0 0.0
    %1058 = vmatprep.subr.mxu0 0.0
    %1059 = vmatpush1.msra.mxu0 0.0
    %1060 = vmatprep.subr.mxu0 0.0
    %1061 = vmatpush1.msra.mxu0 0.0
    %1062 = vmatprep.subr.mxu0 0.0
    %1063 = vmatpush1.msra.mxu0 0.0
    %1064 = vmatprep.subr.mxu0 0.0
    %1065 = vmatpush1.msra.mxu0 0.0
    %1066 = vmatprep.subr.mxu0 0.0
    %1067 = vmatpush1.msra.mxu0 0.0
    %1068 = vmatprep.subr.mxu0 0.0
    %1069 = vmatpush1.msra.mxu0 0.0
    %1070 = vmatprep.subr.mxu0 0.0
    %1071 = vmatpush1.msra.mxu0 0.0
    %1072 = vmatprep.subr.mxu0 0.0
    %1073 = vmatpush1.msra.mxu0 0.0
    %1074 = vmatprep.subr.mxu0 0.0
    %1075 = vmatpush1.msra.mxu0 0.0
    %1076 = vmatprep.subr.mxu0 0.0
    %1077 = vmatpush1.msra.mxu0 0.0
    %1078 = vmatprep.subr.mxu0 0.0
    %1079 = vmatpush1.msra.mxu0 0.0
    %1080 = vmatprep.subr.mxu0 0.0
    %1081 = vmatpush1.msra.mxu0 0.0
    %1082 = vmatprep.subr.mxu0 0.0
    %1083 = vmatpush1.msra.mxu0 0.0
    %1084 = vmatprep.subr.mxu0 0.0
    %1085 = vmatpush1.msra.mxu0 %v1050
    %1086 = vmatprep.subr.mxu0 0.0
    %1087 = vmatpush2.msra.mxu0 0.0
    %1088 = vmatprep.subr.mxu0 0.0
    %1089 = vmatpush2.msra.mxu0 0.0
    %1090 = vmatprep.subr.mxu0 0.0
    %1091 = vmatpush2.msra.mxu0 0.0
    %1092 = vmatprep.subr.mxu0 0.0
    %1093 = vmatpush2.msra.mxu0 0.0
    %1094 = vmatprep.subr.mxu0 0.0
    %1095 = vmatpush2.msra.mxu0 0.0
    %1096 = vmatprep.subr.mxu0 0.0
    %1097 = vmatpush2.msra.mxu0 0.0
    %1098 = vmatprep.subr.mxu0 0.0
    %1099 = vmatpush2.msra.mxu0 0.0
    %1100 = vmatprep.subr.mxu0 0.0
    %1101 = vmatpush2.msra.mxu0 0.0
    %1102 = vmatprep.subr.mxu0 0.0
    %1103 = vmatpush2.msra.mxu0 0.0
    %1104 = vmatprep.subr.mxu0 0.0
    %1105 = vmatpush2.msra.mxu0 0.0
    %1106 = vmatprep.subr.mxu0 0.0
    %1107 = vmatpush2.msra.mxu0 0.0
    %1108 = vmatprep.subr.mxu0 0.0
    %1109 = vmatpush2.msra.mxu0 0.0
    %1110 = vmatprep.subr.mxu0 0.0
    %1111 = vmatpush2.msra.mxu0 0.0
    %1112 = vmatprep.subr.mxu0 0.0
    %1113 = vmatpush2.msra.mxu0 0.0
    %1114 = vmatprep.subr.mxu0 0.0
    %1115 = vmatpush2.msra.mxu0 0.0
    %1116 = vmatprep.subr.mxu0 0.0
    %1117 = vmatpush2.msra.mxu0 0.0
    %1118 = vmatprep.mubr.f32.mxu0 0.0
    %1119 = vmatmul.mubr.f32.gmra.mxu0 %v1052
    %v1120 = vpop.f32.mrf.mxu0
    %v1121 = vadd.f32 0.0, %v1120
    %v1122 = vpop.f32.mrf.mxu0
    %1123 = vdwg.mxu0
    %v1124 = vadd.f32 %v976, %v1121
    %s1125 = scalar_lea.vmem %s2, 12
    %v1126 = vld [vmem:[%s1125] sm:$0x3]
    %1127 = vmatprep.subr.mxu0 0.0
    %1128 = vmatpush1.msra.mxu0 %v237
    %1129 = vmatprep.subr.mxu0 0.0
    %1130 = vmatpush1.msra.mxu0 %v232
    %1131 = vmatprep.subr.mxu0 0.0
    %1132 = vmatpush1.msra.mxu0 %v227
    %1133 = vmatprep.subr.mxu0 0.0
    %1134 = vmatpush1.msra.mxu0 %v222
    %1135 = vmatprep.subr.mxu0 0.0
    %1136 = vmatpush1.msra.mxu0 %v217
    %1137 = vmatprep.subr.mxu0 0.0
    %1138 = vmatpush1.msra.mxu0 %v212
    %1139 = vmatprep.subr.mxu0 0.0
    %1140 = vmatpush1.msra.mxu0 %v207
    %1141 = vmatprep.subr.mxu0 0.0
    %1142 = vmatpush1.msra.mxu0 %v202
    %1143 = vmatprep.subr.mxu0 0.0
    %1144 = vmatpush1.msra.mxu0 %v197
    %1145 = vmatprep.subr.mxu0 0.0
    %1146 = vmatpush1.msra.mxu0 %v192
    %1147 = vmatprep.subr.mxu0 0.0
    %1148 = vmatpush1.msra.mxu0 %v187
    %1149 = vmatprep.subr.mxu0 0.0
    %1150 = vmatpush1.msra.mxu0 %v182
    %1151 = vmatprep.subr.mxu0 0.0
    %1152 = vmatpush1.msra.mxu0 %v177
    %1153 = vmatprep.subr.mxu0 0.0
    %1154 = vmatpush1.msra.mxu0 %v172
    %1155 = vmatprep.subr.mxu0 0.0
    %1156 = vmatpush1.msra.mxu0 %v167
    %1157 = vmatprep.subr.mxu0 0.0
    %1158 = vmatpush1.msra.mxu0 %v162
    %1159 = vmatprep.subr.mxu0 0.0
    %1160 = vmatpush2.msra.mxu0 0.0
    %1161 = vmatprep.subr.mxu0 0.0
    %1162 = vmatpush2.msra.mxu0 0.0
    %1163 = vmatprep.subr.mxu0 0.0
    %1164 = vmatpush2.msra.mxu0 0.0
    %1165 = vmatprep.subr.mxu0 0.0
    %1166 = vmatpush2.msra.mxu0 0.0
    %1167 = vmatprep.subr.mxu0 0.0
    %1168 = vmatpush2.msra.mxu0 0.0
    %1169 = vmatprep.subr.mxu0 0.0
    %1170 = vmatpush2.msra.mxu0 0.0
    %1171 = vmatprep.subr.mxu0 0.0
    %1172 = vmatpush2.msra.mxu0 0.0
    %1173 = vmatprep.subr.mxu0 0.0
    %1174 = vmatpush2.msra.mxu0 0.0
    %1175 = vmatprep.subr.mxu0 0.0
    %1176 = vmatpush2.msra.mxu0 0.0
    %1177 = vmatprep.subr.mxu0 0.0
    %1178 = vmatpush2.msra.mxu0 0.0
    %1179 = vmatprep.subr.mxu0 0.0
    %1180 = vmatpush2.msra.mxu0 0.0
    %1181 = vmatprep.subr.mxu0 0.0
    %1182 = vmatpush2.msra.mxu0 0.0
    %1183 = vmatprep.subr.mxu0 0.0
    %1184 = vmatpush2.msra.mxu0 0.0
    %1185 = vmatprep.subr.mxu0 0.0
    %1186 = vmatpush2.msra.mxu0 0.0
    %1187 = vmatprep.subr.mxu0 0.0
    %1188 = vmatpush2.msra.mxu0 0.0
    %1189 = vmatprep.subr.mxu0 0.0
    %1190 = vmatpush2.msra.mxu0 0.0
    %1191 = vmatprep.mubr.f32.mxu0 0.0
    %1192 = vmatmul.mubr.f32.gmra.mxu0 %v1126
    %v1193 = vpop.f32.mrf.mxu0
    %v1194 = vadd.f32 0.0, %v1193
    %v1195 = vpop.f32.mrf.mxu0
    %1196 = vdwg.mxu0
    %s1197 = scalar_lea.vmem %s3, 48
    %v1198 = vld [vmem:[%s1197] sm:$0xff]
    %v1200 = vsel %vm386, %v1194, 0
    %1202 = vmatprep.subr.mxu0 0.0
    %1203 = vmatpush1.msra.mxu0 0.0
    %1204 = vmatprep.subr.mxu0 0.0
    %1205 = vmatpush1.msra.mxu0 0.0
    %1206 = vmatprep.subr.mxu0 0.0
    %1207 = vmatpush1.msra.mxu0 0.0
    %1208 = vmatprep.subr.mxu0 0.0
    %1209 = vmatpush1.msra.mxu0 0.0
    %1210 = vmatprep.subr.mxu0 0.0
    %1211 = vmatpush1.msra.mxu0 0.0
    %1212 = vmatprep.subr.mxu0 0.0
    %1213 = vmatpush1.msra.mxu0 0.0
    %1214 = vmatprep.subr.mxu0 0.0
    %1215 = vmatpush1.msra.mxu0 0.0
    %1216 = vmatprep.subr.mxu0 0.0
    %1217 = vmatpush1.msra.mxu0 0.0
    %1218 = vmatprep.subr.mxu0 0.0
    %1219 = vmatpush1.msra.mxu0 0.0
    %1220 = vmatprep.subr.mxu0 0.0
    %1221 = vmatpush1.msra.mxu0 0.0
    %1222 = vmatprep.subr.mxu0 0.0
    %1223 = vmatpush1.msra.mxu0 0.0
    %1224 = vmatprep.subr.mxu0 0.0
    %1225 = vmatpush1.msra.mxu0 0.0
    %1226 = vmatprep.subr.mxu0 0.0
    %1227 = vmatpush1.msra.mxu0 0.0
    %1228 = vmatprep.subr.mxu0 0.0
    %1229 = vmatpush1.msra.mxu0 0.0
    %1230 = vmatprep.subr.mxu0 0.0
    %1231 = vmatpush1.msra.mxu0 0.0
    %1232 = vmatprep.subr.mxu0 0.0
    %1233 = vmatpush1.msra.mxu0 %v1198
    %1234 = vmatprep.subr.mxu0 0.0
    %1235 = vmatpush2.msra.mxu0 0.0
    %1236 = vmatprep.subr.mxu0 0.0
    %1237 = vmatpush2.msra.mxu0 0.0
    %1238 = vmatprep.subr.mxu0 0.0
    %1239 = vmatpush2.msra.mxu0 0.0
    %1240 = vmatprep.subr.mxu0 0.0
    %1241 = vmatpush2.msra.mxu0 0.0
    %1242 = vmatprep.subr.mxu0 0.0
    %1243 = vmatpush2.msra.mxu0 0.0
    %1244 = vmatprep.subr.mxu0 0.0
    %1245 = vmatpush2.msra.mxu0 0.0
    %1246 = vmatprep.subr.mxu0 0.0
    %1247 = vmatpush2.msra.mxu0 0.0
    %1248 = vmatprep.subr.mxu0 0.0
    %1249 = vmatpush2.msra.mxu0 0.0
    %1250 = vmatprep.subr.mxu0 0.0
    %1251 = vmatpush2.msra.mxu0 0.0
    %1252 = vmatprep.subr.mxu0 0.0
    %1253 = vmatpush2.msra.mxu0 0.0
    %1254 = vmatprep.subr.mxu0 0.0
    %1255 = vmatpush2.msra.mxu0 0.0
    %1256 = vmatprep.subr.mxu0 0.0
    %1257 = vmatpush2.msra.mxu0 0.0
    %1258 = vmatprep.subr.mxu0 0.0
    %1259 = vmatpush2.msra.mxu0 0.0
    %1260 = vmatprep.subr.mxu0 0.0
    %1261 = vmatpush2.msra.mxu0 0.0
    %1262 = vmatprep.subr.mxu0 0.0
    %1263 = vmatpush2.msra.mxu0 0.0
    %1264 = vmatprep.subr.mxu0 0.0
    %1265 = vmatpush2.msra.mxu0 0.0
    %1266 = vmatprep.mubr.f32.mxu0 0.0
    %1267 = vmatmul.mubr.f32.gmra.mxu0 %v1200
    %v1268 = vpop.f32.mrf.mxu0
    %v1269 = vadd.f32 0.0, %v1268
    %v1270 = vpop.f32.mrf.mxu0
    %1271 = vdwg.mxu0
    %v1272 = vadd.f32 %v1124, %v1269
    %s1273 = scalar_lea.vmem %s2, 14
    %v1274 = vld [vmem:[%s1273] sm:$0x3]
    %1275 = vmatprep.subr.mxu0 0.0
    %1276 = vmatpush1.msra.mxu0 %v237
    %1277 = vmatprep.subr.mxu0 0.0
    %1278 = vmatpush1.msra.mxu0 %v232
    %1279 = vmatprep.subr.mxu0 0.0
    %1280 = vmatpush1.msra.mxu0 %v227
    %1281 = vmatprep.subr.mxu0 0.0
    %1282 = vmatpush1.msra.mxu0 %v222
    %1283 = vmatprep.subr.mxu0 0.0
    %1284 = vmatpush1.msra.mxu0 %v217
    %1285 = vmatprep.subr.mxu0 0.0
    %1286 = vmatpush1.msra.mxu0 %v212
    %1287 = vmatprep.subr.mxu0 0.0
    %1288 = vmatpush1.msra.mxu0 %v207
    %1289 = vmatprep.subr.mxu0 0.0
    %1290 = vmatpush1.msra.mxu0 %v202
    %1291 = vmatprep.subr.mxu0 0.0
    %1292 = vmatpush1.msra.mxu0 %v197
    %1293 = vmatprep.subr.mxu0 0.0
    %1294 = vmatpush1.msra.mxu0 %v192
    %1295 = vmatprep.subr.mxu0 0.0
    %1296 = vmatpush1.msra.mxu0 %v187
    %1297 = vmatprep.subr.mxu0 0.0
    %1298 = vmatpush1.msra.mxu0 %v182
    %1299 = vmatprep.subr.mxu0 0.0
    %1300 = vmatpush1.msra.mxu0 %v177
    %1301 = vmatprep.subr.mxu0 0.0
    %1302 = vmatpush1.msra.mxu0 %v172
    %1303 = vmatprep.subr.mxu0 0.0
    %1304 = vmatpush1.msra.mxu0 %v167
    %1305 = vmatprep.subr.mxu0 0.0
    %1306 = vmatpush1.msra.mxu0 %v162
    %1307 = vmatprep.subr.mxu0 0.0
    %1308 = vmatpush2.msra.mxu0 0.0
    %1309 = vmatprep.subr.mxu0 0.0
    %1310 = vmatpush2.msra.mxu0 0.0
    %1311 = vmatprep.subr.mxu0 0.0
    %1312 = vmatpush2.msra.mxu0 0.0
    %1313 = vmatprep.subr.mxu0 0.0
    %1314 = vmatpush2.msra.mxu0 0.0
    %1315 = vmatprep.subr.mxu0 0.0
    %1316 = vmatpush2.msra.mxu0 0.0
    %1317 = vmatprep.subr.mxu0 0.0
    %1318 = vmatpush2.msra.mxu0 0.0
    %1319 = vmatprep.subr.mxu0 0.0
    %1320 = vmatpush2.msra.mxu0 0.0
    %1321 = vmatprep.subr.mxu0 0.0
    %1322 = vmatpush2.msra.mxu0 0.0
    %1323 = vmatprep.subr.mxu0 0.0
    %1324 = vmatpush2.msra.mxu0 0.0
    %1325 = vmatprep.subr.mxu0 0.0
    %1326 = vmatpush2.msra.mxu0 0.0
    %1327 = vmatprep.subr.mxu0 0.0
    %1328 = vmatpush2.msra.mxu0 0.0
    %1329 = vmatprep.subr.mxu0 0.0
    %1330 = vmatpush2.msra.mxu0 0.0
    %1331 = vmatprep.subr.mxu0 0.0
    %1332 = vmatpush2.msra.mxu0 0.0
    %1333 = vmatprep.subr.mxu0 0.0
    %1334 = vmatpush2.msra.mxu0 0.0
    %1335 = vmatprep.subr.mxu0 0.0
    %1336 = vmatpush2.msra.mxu0 0.0
    %1337 = vmatprep.subr.mxu0 0.0
    %1338 = vmatpush2.msra.mxu0 0.0
    %1339 = vmatprep.mubr.f32.mxu0 0.0
    %1340 = vmatmul.mubr.f32.gmra.mxu0 %v1274
    %v1341 = vpop.f32.mrf.mxu0
    %v1342 = vadd.f32 0.0, %v1341
    %v1343 = vpop.f32.mrf.mxu0
    %1344 = vdwg.mxu0
    %s1345 = scalar_lea.vmem %s3, 56
    %v1346 = vld [vmem:[%s1345] sm:$0xff]
    %v1348 = vsel %vm386, %v1342, 0
    %1350 = vmatprep.subr.mxu0 0.0
    %1351 = vmatpush1.msra.mxu0 0.0
    %1352 = vmatprep.subr.mxu0 0.0
    %1353 = vmatpush1.msra.mxu0 0.0
    %1354 = vmatprep.subr.mxu0 0.0
    %1355 = vmatpush1.msra.mxu0 0.0
    %1356 = vmatprep.subr.mxu0 0.0
    %1357 = vmatpush1.msra.mxu0 0.0
    %1358 = vmatprep.subr.mxu0 0.0
    %1359 = vmatpush1.msra.mxu0 0.0
    %1360 = vmatprep.subr.mxu0 0.0
    %1361 = vmatpush1.msra.mxu0 0.0
    %1362 = vmatprep.subr.mxu0 0.0
    %1363 = vmatpush1.msra.mxu0 0.0
    %1364 = vmatprep.subr.mxu0 0.0
    %1365 = vmatpush1.msra.mxu0 0.0
    %1366 = vmatprep.subr.mxu0 0.0
    %1367 = vmatpush1.msra.mxu0 0.0
    %1368 = vmatprep.subr.mxu0 0.0
    %1369 = vmatpush1.msra.mxu0 0.0
    %1370 = vmatprep.subr.mxu0 0.0
    %1371 = vmatpush1.msra.mxu0 0.0
    %1372 = vmatprep.subr.mxu0 0.0
    %1373 = vmatpush1.msra.mxu0 0.0
    %1374 = vmatprep.subr.mxu0 0.0
    %1375 = vmatpush1.msra.mxu0 0.0
    %1376 = vmatprep.subr.mxu0 0.0
    %1377 = vmatpush1.msra.mxu0 0.0
    %1378 = vmatprep.subr.mxu0 0.0
    %1379 = vmatpush1.msra.mxu0 0.0
    %1380 = vmatprep.subr.mxu0 0.0
    %1381 = vmatpush1.msra.mxu0 %v1346
    %1382 = vmatprep.subr.mxu0 0.0
    %1383 = vmatpush2.msra.mxu0 0.0
    %1384 = vmatprep.subr.mxu0 0.0
    %1385 = vmatpush2.msra.mxu0 0.0
    %1386 = vmatprep.subr.mxu0 0.0
    %1387 = vmatpush2.msra.mxu0 0.0
    %1388 = vmatprep.subr.mxu0 0.0
    %1389 = vmatpush2.msra.mxu0 0.0
    %1390 = vmatprep.subr.mxu0 0.0
    %1391 = vmatpush2.msra.mxu0 0.0
    %1392 = vmatprep.subr.mxu0 0.0
    %1393 = vmatpush2.msra.mxu0 0.0
    %1394 = vmatprep.subr.mxu0 0.0
    %1395 = vmatpush2.msra.mxu0 0.0
    %1396 = vmatprep.subr.mxu0 0.0
    %1397 = vmatpush2.msra.mxu0 0.0
    %1398 = vmatprep.subr.mxu0 0.0
    %1399 = vmatpush2.msra.mxu0 0.0
    %1400 = vmatprep.subr.mxu0 0.0
    %1401 = vmatpush2.msra.mxu0 0.0
    %1402 = vmatprep.subr.mxu0 0.0
    %1403 = vmatpush2.msra.mxu0 0.0
    %1404 = vmatprep.subr.mxu0 0.0
    %1405 = vmatpush2.msra.mxu0 0.0
    %1406 = vmatprep.subr.mxu0 0.0
    %1407 = vmatpush2.msra.mxu0 0.0
    %1408 = vmatprep.subr.mxu0 0.0
    %1409 = vmatpush2.msra.mxu0 0.0
    %1410 = vmatprep.subr.mxu0 0.0
    %1411 = vmatpush2.msra.mxu0 0.0
    %1412 = vmatprep.subr.mxu0 0.0
    %1413 = vmatpush2.msra.mxu0 0.0
    %1414 = vmatprep.mubr.f32.mxu0 0.0
    %1415 = vmatmul.mubr.f32.gmra.mxu0 %v1348
    %v1416 = vpop.f32.mrf.mxu0
    %v1417 = vadd.f32 0.0, %v1416
    %v1418 = vpop.f32.mrf.mxu0
    %1419 = vdwg.mxu0
    %v1420 = vadd.f32 %v1272, %v1417
    %s1421 = scalar_lea.vmem %s2, 16
    %v1422 = vld [vmem:[%s1421] sm:$0x3]
    %1423 = vmatprep.subr.mxu0 0.0
    %1424 = vmatpush1.msra.mxu0 %v237
    %1425 = vmatprep.subr.mxu0 0.0
    %1426 = vmatpush1.msra.mxu0 %v232
    %1427 = vmatprep.subr.mxu0 0.0
    %1428 = vmatpush1.msra.mxu0 %v227
    %1429 = vmatprep.subr.mxu0 0.0
    %1430 = vmatpush1.msra.mxu0 %v222
    %1431 = vmatprep.subr.mxu0 0.0
    %1432 = vmatpush1.msra.mxu0 %v217
    %1433 = vmatprep.subr.mxu0 0.0
    %1434 = vmatpush1.msra.mxu0 %v212
    %1435 = vmatprep.subr.mxu0 0.0
    %1436 = vmatpush1.msra.mxu0 %v207
    %1437 = vmatprep.subr.mxu0 0.0
    %1438 = vmatpush1.msra.mxu0 %v202
    %1439 = vmatprep.subr.mxu0 0.0
    %1440 = vmatpush1.msra.mxu0 %v197
    %1441 = vmatprep.subr.mxu0 0.0
    %1442 = vmatpush1.msra.mxu0 %v192
    %1443 = vmatprep.subr.mxu0 0.0
    %1444 = vmatpush1.msra.mxu0 %v187
    %1445 = vmatprep.subr.mxu0 0.0
    %1446 = vmatpush1.msra.mxu0 %v182
    %1447 = vmatprep.subr.mxu0 0.0
    %1448 = vmatpush1.msra.mxu0 %v177
    %1449 = vmatprep.subr.mxu0 0.0
    %1450 = vmatpush1.msra.mxu0 %v172
    %1451 = vmatprep.subr.mxu0 0.0
    %1452 = vmatpush1.msra.mxu0 %v167
    %1453 = vmatprep.subr.mxu0 0.0
    %1454 = vmatpush1.msra.mxu0 %v162
    %1455 = vmatprep.subr.mxu0 0.0
    %1456 = vmatpush2.msra.mxu0 0.0
    %1457 = vmatprep.subr.mxu0 0.0
    %1458 = vmatpush2.msra.mxu0 0.0
    %1459 = vmatprep.subr.mxu0 0.0
    %1460 = vmatpush2.msra.mxu0 0.0
    %1461 = vmatprep.subr.mxu0 0.0
    %1462 = vmatpush2.msra.mxu0 0.0
    %1463 = vmatprep.subr.mxu0 0.0
    %1464 = vmatpush2.msra.mxu0 0.0
    %1465 = vmatprep.subr.mxu0 0.0
    %1466 = vmatpush2.msra.mxu0 0.0
    %1467 = vmatprep.subr.mxu0 0.0
    %1468 = vmatpush2.msra.mxu0 0.0
    %1469 = vmatprep.subr.mxu0 0.0
    %1470 = vmatpush2.msra.mxu0 0.0
    %1471 = vmatprep.subr.mxu0 0.0
    %1472 = vmatpush2.msra.mxu0 0.0
    %1473 = vmatprep.subr.mxu0 0.0
    %1474 = vmatpush2.msra.mxu0 0.0
    %1475 = vmatprep.subr.mxu0 0.0
    %1476 = vmatpush2.msra.mxu0 0.0
    %1477 = vmatprep.subr.mxu0 0.0
    %1478 = vmatpush2.msra.mxu0 0.0
    %1479 = vmatprep.subr.mxu0 0.0
    %1480 = vmatpush2.msra.mxu0 0.0
    %1481 = vmatprep.subr.mxu0 0.0
    %1482 = vmatpush2.msra.mxu0 0.0
    %1483 = vmatprep.subr.mxu0 0.0
    %1484 = vmatpush2.msra.mxu0 0.0
    %1485 = vmatprep.subr.mxu0 0.0
    %1486 = vmatpush2.msra.mxu0 0.0
    %1487 = vmatprep.mubr.f32.mxu0 0.0
    %1488 = vmatmul.mubr.f32.gmra.mxu0 %v1422
    %v1489 = vpop.f32.mrf.mxu0
    %v1490 = vadd.f32 0.0, %v1489
    %v1491 = vpop.f32.mrf.mxu0
    %1492 = vdwg.mxu0
    %s1493 = scalar_lea.vmem %s3, 64
    %v1494 = vld [vmem:[%s1493] sm:$0xff]
    %v1496 = vsel %vm386, %v1490, 0
    %1498 = vmatprep.subr.mxu0 0.0
    %1499 = vmatpush1.msra.mxu0 0.0
    %1500 = vmatprep.subr.mxu0 0.0
    %1501 = vmatpush1.msra.mxu0 0.0
    %1502 = vmatprep.subr.mxu0 0.0
    %1503 = vmatpush1.msra.mxu0 0.0
    %1504 = vmatprep.subr.mxu0 0.0
    %1505 = vmatpush1.msra.mxu0 0.0
    %1506 = vmatprep.subr.mxu0 0.0
    %1507 = vmatpush1.msra.mxu0 0.0
    %1508 = vmatprep.subr.mxu0 0.0
    %1509 = vmatpush1.msra.mxu0 0.0
    %1510 = vmatprep.subr.mxu0 0.0
    %1511 = vmatpush1.msra.mxu0 0.0
    %1512 = vmatprep.subr.mxu0 0.0
    %1513 = vmatpush1.msra.mxu0 0.0
    %1514 = vmatprep.subr.mxu0 0.0
    %1515 = vmatpush1.msra.mxu0 0.0
    %1516 = vmatprep.subr.mxu0 0.0
    %1517 = vmatpush1.msra.mxu0 0.0
    %1518 = vmatprep.subr.mxu0 0.0
    %1519 = vmatpush1.msra.mxu0 0.0
    %1520 = vmatprep.subr.mxu0 0.0
    %1521 = vmatpush1.msra.mxu0 0.0
    %1522 = vmatprep.subr.mxu0 0.0
    %1523 = vmatpush1.msra.mxu0 0.0
    %1524 = vmatprep.subr.mxu0 0.0
    %1525 = vmatpush1.msra.mxu0 0.0
    %1526 = vmatprep.subr.mxu0 0.0
    %1527 = vmatpush1.msra.mxu0 0.0
    %1528 = vmatprep.subr.mxu0 0.0
    %1529 = vmatpush1.msra.mxu0 %v1494
    %1530 = vmatprep.subr.mxu0 0.0
    %1531 = vmatpush2.msra.mxu0 0.0
    %1532 = vmatprep.subr.mxu0 0.0
    %1533 = vmatpush2.msra.mxu0 0.0
    %1534 = vmatprep.subr.mxu0 0.0
    %1535 = vmatpush2.msra.mxu0 0.0
    %1536 = vmatprep.subr.mxu0 0.0
    %1537 = vmatpush2.msra.mxu0 0.0
    %1538 = vmatprep.subr.mxu0 0.0
    %1539 = vmatpush2.msra.mxu0 0.0
    %1540 = vmatprep.subr.mxu0 0.0
    %1541 = vmatpush2.msra.mxu0 0.0
    %1542 = vmatprep.subr.mxu0 0.0
    %1543 = vmatpush2.msra.mxu0 0.0
    %1544 = vmatprep.subr.mxu0 0.0
    %1545 = vmatpush2.msra.mxu0 0.0
    %1546 = vmatprep.subr.mxu0 0.0
    %1547 = vmatpush2.msra.mxu0 0.0
    %1548 = vmatprep.subr.mxu0 0.0
    %1549 = vmatpush2.msra.mxu0 0.0
    %1550 = vmatprep.subr.mxu0 0.0
    %1551 = vmatpush2.msra.mxu0 0.0
    %1552 = vmatprep.subr.mxu0 0.0
    %1553 = vmatpush2.msra.mxu0 0.0
    %1554 = vmatprep.subr.mxu0 0.0
    %1555 = vmatpush2.msra.mxu0 0.0
    %1556 = vmatprep.subr.mxu0 0.0
    %1557 = vmatpush2.msra.mxu0 0.0
    %1558 = vmatprep.subr.mxu0 0.0
    %1559 = vmatpush2.msra.mxu0 0.0
    %1560 = vmatprep.subr.mxu0 0.0
    %1561 = vmatpush2.msra.mxu0 0.0
    %1562 = vmatprep.mubr.f32.mxu0 0.0
    %1563 = vmatmul.mubr.f32.gmra.mxu0 %v1496
    %v1564 = vpop.f32.mrf.mxu0
    %v1565 = vadd.f32 0.0, %v1564
    %v1566 = vpop.f32.mrf.mxu0
    %1567 = vdwg.mxu0
    %v1568 = vadd.f32 %v1420, %v1565
    %v1569 = vld [vmem:[%s4] sm:$0x1]
    %v1571 = vlaneseq
    %v1572 = vshrl.u32 %v1571, 7
    %v1573 = vsub.s32 0, %v1572
    %v1574 = vrot.slane %v1569, %v1573
    %v1576 = vadd.f32 %v1568, %v1574
    %v1577 = vsub.f32 0.0, %v1576
    %v1578 = vmul.f32 %v1577, 1.442695
    %v1579 = vpow.pop %v1578
    %v1580 = vadd.f32 %v1579, 1.0
    %v1581 = vrcp.pop %v1580
    %v1582 = vmul.f32 1.0, %v1581
    %vm1583 = vcmask 58368
    %1584 = vst.msk [vmem:[#allocation2] sm:$0x3] %vm1583, %v1582
    // Predicated region
    $region22: #{weight_learning_forward.1} parent=1 // pred_check
      _
    $region23: #{weight_learning_forward.1} parent=1 // pred_check_branch
      %1586 = sbr.rel (0) target = $region25
    $region24: #{weight_learning_forward.1} parent=1 // pred_region
      %s1588 = ssub.s32 32, 32
      %1589 = vsyncadd [#allocation3], %s1588
      %s1591 = sshll.u32 [#allocation2], 4
      %s1592 = int_to_ptr.vmem [resolvable:$true] %s1591
      %1594 = dma.vmem_to_hbm [thread:$0]  %s1592, 32, %s5, [#allocation3]
    $region25: #{weight_learning_forward.1} parent=1 // pred_fallthru
      _
    // Predicated region
    $region26: #{weight_learning_forward.1} parent=1 // pred_check
      _
    $region27: #{weight_learning_forward.1} parent=1 // pred_check_branch
      %1596 = sbr.rel (0) target = $region29
    $region28: #{weight_learning_forward.1} parent=1 // pred_region
      %1597 = dma.done [#allocation3], 32
    $region29: #{weight_learning_forward.1} parent=1 // pred_fallthru
      _
    %1598 = vsyncpa [#allocation3], 1

</llo_original>
